<compile_context>
chip_gen: v5e
topology: v5e:2x2
jax: 0.10.0
libtpu: 0.0.40
codegen_flags: <defaults>
</compile_context>

<pallas_src>
import jax
import jax.numpy as jnp
import numpy as np
from jax.experimental import pallas as pl
from jax.experimental.pallas import tpu as pltpu


def refiner_kernel(x_ref,
                   w1_ref, t1_ref,
                   w2_ref, t2_ref,
                   w3_ref, t3_ref,
                   w4t_ref, b4_ref,
                   o_ref):
    # Per-tile VPU cast; x stays f32 in HBM (no wrapper-side bf16 round-trip).
    x = x_ref[0].astype(jnp.bfloat16)                                   # (C1, tn)
    h1 = jnp.dot(w1_ref[...], x, preferred_element_type=jnp.float32)    # (C1, tn) f32
    h1 = jnp.maximum(h1 + t1_ref[...], 0.0).astype(jnp.bfloat16)        # conv1+bn1+relu
    h2 = jnp.dot(w2_ref[...], h1, preferred_element_type=jnp.float32)   # (C2, tn)
    h2 = jnp.maximum(h2 + t2_ref[...], 0.0).astype(jnp.bfloat16)        # conv2+bn2+relu
    h3 = jnp.dot(w3_ref[...], h2, preferred_element_type=jnp.float32)   # (C3, tn)
    h3 = jnp.maximum(h3 + t3_ref[...], 0.0)                             # conv3+bn3+relu (f32)
    # Head (conv4 + tanh): CO=2, so an MXU matmul would pad M=2 to a full MXU
    # tile.  Compute each output row as a VPU broadcast-multiply over (C3, tn)
    # plus an XLU sublane reduction instead.
    w4t = w4t_ref[...]                                                  # (C3, CO) f32
    rows = [jnp.sum(w4t[:, co:co + 1] * h3, axis=0, keepdims=True)      # (1, tn)
            for co in range(w4t_ref.shape[1])]
    o = jnp.concatenate(rows, axis=0) + b4_ref[...]                     # (CO, tn)
    o_ref[0] = jnp.tanh(o)                                              # conv4+tanh


def _choose_tn(batch, n, tn_max=1024):
    """Largest 128-multiple lane tile <= tn_max dividing n, keeping >= 2 grid steps."""
    if n % 128 != 0:
        return n                       # whole-N tile (legal: equals the full dim)
    cands = [t for t in (2048, 1024, 512, 256, 128) if t <= tn_max and n % t == 0]
    if not cands:
        return n
    for t in cands:
        if batch * (n // t) >= 2:      # occupancy for v7x's 2 TCs / megacore
            return t
    return cands[-1]


def refiner_forward(x_bcn, params, *, tn=None, vmem_limit_bytes=48 * 1024 * 1024):
    """x_bcn: (B, C1, N) float32, PyTorch NCW layout.  Returns (B, 2, N) float32.

    `params` must come from make_params (BN folded, w1..w3 pre-cast to bf16,
    w4 stored transposed as (C3, CO)).
    """
    (w1, t1, w2, t2, w3, t3, w4t, b4) = params
    B, C1, N = x_bcn.shape
    if tn is None:
        tn = _choose_tn(B, N)
    assert N % tn == 0, "N (num points) must be a multiple of the lane tile tn"
    assert tn % 128 == 0 or tn == N, "lane tile must be a multiple of 128 (or == N)"

    C2 = w2.shape[0]
    C3 = w3.shape[0]
    CO = w4t.shape[1]

    full = lambda shape: pl.BlockSpec(shape, lambda b, n: (0, 0))

    flops = 2 * B * N * (C1 * C1 + C2 * C1 + C3 * C2 + CO * C3)
    bytes_accessed = (B * C1 * N * 4                                    # x (f32, read once)
                      + (C1 * C1 + C2 * C1 + C3 * C2) * 2 + C3 * CO * 4  # weights
                      + (C1 + C2 + C3 + CO) * 4                          # shifts
                      + B * CO * N * 4)                                   # output
    cost = pl.CostEstimate(flops=flops,
                           transcendentals=B * N * CO,
                           bytes_accessed=bytes_accessed)

    return pl.pallas_call(
        refiner_kernel,
        out_shape=jax.ShapeDtypeStruct((B, CO, N), jnp.float32),
        grid_spec=pltpu.PrefetchScalarGridSpec(
            num_scalar_prefetch=0,
            grid=(B, N // tn),
            in_specs=[
                pl.BlockSpec((1, C1, tn), lambda b, n: (b, 0, n)),      # x slab, N on lanes
                full((C1, C1)), full((C1, 1)),                          # layer 1 (BN folded)
                full((C2, C1)), full((C2, 1)),                          # layer 2
                full((C3, C2)), full((C3, 1)),                          # layer 3
                full((C3, CO)), full((CO, 1)),                          # head (w4 transposed)
            ],
            out_specs=pl.BlockSpec((1, CO, tn), lambda b, n: (b, 0, n)),
        ),
        compiler_params=pltpu.CompilerParams(
            dimension_semantics=("parallel", "parallel"),
            vmem_limit_bytes=vmem_limit_bytes),
        cost_estimate=cost,
    )(x_bcn, w1, t1, w2, t2, w3, t3, w4t, b4)


def make_params(key, bottleneck_size):
    """Deterministic synthetic parameters matching the module's shapes.

    Conv1d(k=1) weight (out, in, 1) is stored squeezed as (out, in).  BatchNorm
    is eval-mode with freshly-initialized running stats (mean=0, var=1);
    gamma/beta are random so the fold is non-trivial.  The BN scale
    s = gamma/sqrt(var+eps) is folded into the weight rows and the shift
    t = (bias - mean)*s + beta is returned as an f32 (C, 1) column.  Folded
    weights w1..w3 are pre-cast to bf16 ONCE here (not per forward call); the
    head weight is kept f32 and stored transposed as (C3, CO) for the in-kernel
    VPU path.
    """
    C1 = bottleneck_size
    C2 = bottleneck_size // 2
    C3 = bottleneck_size // 4
    CO = 2
    eps = 1e-5
    keys = jax.random.split(key, 14)

    def conv(kw, kb, cin, cout):
        w = 0.05 * jax.random.normal(kw, (cout, cin), jnp.float32)
        b = 0.05 * jax.random.normal(kb, (cout,), jnp.float32)
        return w, b

    def bn(kg, kb, c):
        gamma = 1.0 + 0.1 * jax.random.normal(kg, (c,), jnp.float32)
        beta = 0.1 * jax.random.normal(kb, (c,), jnp.float32)
        mean = jnp.zeros((c,), jnp.float32)
        var = jnp.ones((c,), jnp.float32)
        return gamma, beta, mean, var

    def fold(w, b, gamma, beta, mean, var):
        s = gamma / jnp.sqrt(var + eps)
        w_f = w * s[:, None]                      # scale output-channel rows
        t = ((b - mean) * s + beta)[:, None]      # per-channel shift, (C, 1)
        return w_f, t

    w1, b1 = conv(keys[0], keys[1], C1, C1)
    w2, b2 = conv(keys[2], keys[3], C1, C2)
    w3, b3 = conv(keys[4], keys[5], C2, C3)
    w4, b4 = conv(keys[6], keys[7], C3, CO)
    w1f, t1 = fold(w1, b1, *bn(keys[8], keys[9], C1))
    w2f, t2 = fold(w2, b2, *bn(keys[10], keys[11], C2))
    w3f, t3 = fold(w3, b3, *bn(keys[12], keys[13], C3))
    return (w1f.astype(jnp.bfloat16), t1,
            w2f.astype(jnp.bfloat16), t2,
            w3f.astype(jnp.bfloat16), t3,
            w4.T, b4[:, None])


def refiner_reference(x_bcn, params):
    """Plain-JAX f32 reference of the same forward pass (for verification)."""
    (w1, t1, w2, t2, w3, t3, w4t, b4) = params
    f32 = lambda a: a.astype(jnp.float32)
    h = jnp.maximum(jnp.einsum('oc,bcn->bon', f32(w1), x_bcn) + t1[None], 0.0)
    h = jnp.maximum(jnp.einsum('oc,bcn->bon', f32(w2), h) + t2[None], 0.0)
    h = jnp.maximum(jnp.einsum('oc,bcn->bon', f32(w3), h) + t3[None], 0.0)
    return jnp.tanh(jnp.einsum('co,bcn->bon', w4t, h) + b4[None])


if __name__ == "__main__":
    # Small, kernel-aligned stand-in for the default bottleneck_size=1024.
    # NOTE: do not use this config for perf tuning (C2=64 / C3=32 underfill the
    # MXU); the 1024/512/256 production chain is already 256-aligned.
    bottleneck_size = 128
    B, N = 2, 1024             # batch=2, 1024 points -> tn=1024, grid (2, 1)
    key = jax.random.PRNGKey(0)
    kx, kp = jax.random.split(key)

    x = jax.random.normal(kx, (B, bottleneck_size, N), jnp.float32)  # PyTorch NCW input
    params = make_params(kp, bottleneck_size)

    out = jax.block_until_ready(refiner_forward(x, params))

    ref = refiner_reference(x, params)
    assert out.shape == (B, 2, N), out.shape
    # bf16 activations on the MXU with f32 accumulation -> relaxed tolerance vs
    # the f32 reference (which uses the same bf16-rounded weight values).
    np.testing.assert_allclose(np.asarray(out), np.asarray(ref), atol=2e-2, rtol=2e-2)

    print("KERNEL_OK")
</pallas_src>

<mosaic_0001>
module attributes {stable_mosaic.version = 11 : i64} {
  func.func @refiner_kernel(%arg0: i32, %arg1: i32, %arg2: memref<1x128x1024xf32, #tpu.memory_space<vmem>>, %arg3: memref<128x128xbf16, #tpu.memory_space<vmem>>, %arg4: memref<128x1xf32, #tpu.memory_space<vmem>>, %arg5: memref<64x128xbf16, #tpu.memory_space<vmem>>, %arg6: memref<64x1xf32, #tpu.memory_space<vmem>>, %arg7: memref<32x64xbf16, #tpu.memory_space<vmem>>, %arg8: memref<32x1xf32, #tpu.memory_space<vmem>>, %arg9: memref<32x2xf32, #tpu.memory_space<vmem>>, %arg10: memref<2x1xf32, #tpu.memory_space<vmem>>, %arg11: memref<1x2x1024xf32, #tpu.memory_space<vmem>>) attributes {dimension_semantics = [#tpu.dimension_semantics<parallel>, #tpu.dimension_semantics<parallel>], iteration_bounds = array<i64: 2, 1>, scalar_prefetch = 0 : i64, scratch_operands = 0 : i64, tpu.core_type = #tpu.core_type<tc>, window_params = [{transform_indices = @transform_0, window_bounds = array<i64: 1, 128, 1024>}, {pipeline_mode = #tpu.pipeline_mode<synchronous>, transform_indices = @transform_1, window_bounds = array<i64: 128, 128>}, {pipeline_mode = #tpu.pipeline_mode<synchronous>, transform_indices = @transform_2, window_bounds = array<i64: 128, 1>}, {pipeline_mode = #tpu.pipeline_mode<synchronous>, transform_indices = @transform_3, window_bounds = array<i64: 64, 128>}, {pipeline_mode = #tpu.pipeline_mode<synchronous>, transform_indices = @transform_4, window_bounds = array<i64: 64, 1>}, {pipeline_mode = #tpu.pipeline_mode<synchronous>, transform_indices = @transform_5, window_bounds = array<i64: 32, 64>}, {pipeline_mode = #tpu.pipeline_mode<synchronous>, transform_indices = @transform_6, window_bounds = array<i64: 32, 1>}, {pipeline_mode = #tpu.pipeline_mode<synchronous>, transform_indices = @transform_7, window_bounds = array<i64: 32, 2>}, {pipeline_mode = #tpu.pipeline_mode<synchronous>, transform_indices = @transform_8, window_bounds = array<i64: 2, 1>}, {transform_indices = @transform_9, window_bounds = array<i64: 1, 2, 1024>}]} {
    %c0 = arith.constant 0 : index
    %c0_0 = arith.constant 0 : index
    %c0_1 = arith.constant 0 : index
    %0 = vector.load %arg2[%c0, %c0_0, %c0_1] : memref<1x128x1024xf32, #tpu.memory_space<vmem>>, vector<1x128x1024xf32>
    %1 = vector.shape_cast %0 : vector<1x128x1024xf32> to vector<128x1024xf32>
    %2 = arith.truncf %1 : vector<128x1024xf32> to vector<128x1024xbf16>
    %c0_2 = arith.constant 0 : index
    %c0_3 = arith.constant 0 : index
    %3 = vector.load %arg3[%c0_2, %c0_3] : memref<128x128xbf16, #tpu.memory_space<vmem>>, vector<128x128xbf16>
    %cst = arith.constant dense<0.000000e+00> : vector<128x1024xf32>
    %4 = tpu.matmul %3, %2, %cst {dimension_numbers = #tpu.dot_dimension_numbers<[1], [0], [0], [1], [0, 0, 1, 1], [], []>} : vector<128x128xbf16>, vector<128x1024xbf16>, vector<128x1024xf32> -> vector<128x1024xf32>
    %c0_4 = arith.constant 0 : index
    %c0_5 = arith.constant 0 : index
    %5 = vector.load %arg4[%c0_4, %c0_5] : memref<128x1xf32, #tpu.memory_space<vmem>>, vector<128x1xf32>
    %6 = vector.broadcast %5 : vector<128x1xf32> to vector<128x1024xf32>
    %7 = arith.addf %4, %6 : vector<128x1024xf32>
    %cst_6 = arith.constant 0.000000e+00 : f32
    %8 = vector.broadcast %cst_6 : f32 to vector<128x1024xf32>
    %9 = arith.maximumf %7, %8 : vector<128x1024xf32>
    %10 = arith.truncf %9 : vector<128x1024xf32> to vector<128x1024xbf16>
    %c0_7 = arith.constant 0 : index
    %c0_8 = arith.constant 0 : index
    %11 = vector.load %arg5[%c0_7, %c0_8] : memref<64x128xbf16, #tpu.memory_space<vmem>>, vector<64x128xbf16>
    %cst_9 = arith.constant dense<0.000000e+00> : vector<64x1024xf32>
    %12 = tpu.matmul %11, %10, %cst_9 {dimension_numbers = #tpu.dot_dimension_numbers<[1], [0], [0], [1], [0, 0, 1, 1], [], []>} : vector<64x128xbf16>, vector<128x1024xbf16>, vector<64x1024xf32> -> vector<64x1024xf32>
    %c0_10 = arith.constant 0 : index
    %c0_11 = arith.constant 0 : index
    %13 = vector.load %arg6[%c0_10, %c0_11] : memref<64x1xf32, #tpu.memory_space<vmem>>, vector<64x1xf32>
    %14 = vector.broadcast %13 : vector<64x1xf32> to vector<64x1024xf32>
    %15 = arith.addf %12, %14 : vector<64x1024xf32>
    %cst_12 = arith.constant 0.000000e+00 : f32
    %16 = vector.broadcast %cst_12 : f32 to vector<64x1024xf32>
    %17 = arith.maximumf %15, %16 : vector<64x1024xf32>
    %18 = arith.truncf %17 : vector<64x1024xf32> to vector<64x1024xbf16>
    %c0_13 = arith.constant 0 : index
    %c0_14 = arith.constant 0 : index
    %19 = vector.load %arg7[%c0_13, %c0_14] : memref<32x64xbf16, #tpu.memory_space<vmem>>, vector<32x64xbf16>
    %cst_15 = arith.constant dense<0.000000e+00> : vector<32x1024xf32>
    %20 = tpu.matmul %19, %18, %cst_15 {dimension_numbers = #tpu.dot_dimension_numbers<[1], [0], [0], [1], [0, 0, 1, 1], [], []>} : vector<32x64xbf16>, vector<64x1024xbf16>, vector<32x1024xf32> -> vector<32x1024xf32>
    %c0_16 = arith.constant 0 : index
    %c0_17 = arith.constant 0 : index
    %21 = vector.load %arg8[%c0_16, %c0_17] : memref<32x1xf32, #tpu.memory_space<vmem>>, vector<32x1xf32>
    %22 = vector.broadcast %21 : vector<32x1xf32> to vector<32x1024xf32>
    %23 = arith.addf %20, %22 : vector<32x1024xf32>
    %cst_18 = arith.constant 0.000000e+00 : f32
    %24 = vector.broadcast %cst_18 : f32 to vector<32x1024xf32>
    %25 = arith.maximumf %23, %24 : vector<32x1024xf32>
    %c0_19 = arith.constant 0 : index
    %c0_20 = arith.constant 0 : index
    %26 = vector.load %arg9[%c0_19, %c0_20] : memref<32x2xf32, #tpu.memory_space<vmem>>, vector<32x2xf32>
    %27 = vector.extract_strided_slice %26 {offsets = [0, 0], sizes = [32, 1], strides = [1, 1]} : vector<32x2xf32> to vector<32x1xf32>
    %28 = vector.broadcast %27 : vector<32x1xf32> to vector<32x1024xf32>
    %29 = arith.mulf %28, %25 : vector<32x1024xf32>
    %cst_21 = arith.constant dense<0.000000e+00> : vector<1024xf32>
    %30 = vector.multi_reduction <add>, %29, %cst_21 [0] : vector<32x1024xf32> to vector<1024xf32>
    %31 = vector.shape_cast %30 : vector<1024xf32> to vector<1x1024xf32>
    %32 = vector.extract_strided_slice %26 {offsets = [0, 1], sizes = [32, 1], strides = [1, 1]} : vector<32x2xf32> to vector<32x1xf32>
    %33 = vector.broadcast %32 : vector<32x1xf32> to vector<32x1024xf32>
    %34 = arith.mulf %33, %25 : vector<32x1024xf32>
    %cst_22 = arith.constant dense<0.000000e+00> : vector<1024xf32>
    %35 = vector.multi_reduction <add>, %34, %cst_22 [0] : vector<32x1024xf32> to vector<1024xf32>
    %36 = vector.shape_cast %35 : vector<1024xf32> to vector<1x1024xf32>
    %37 = tpu.concatenate %31, %36 in 0 : vector<1x1024xf32>, vector<1x1024xf32> -> vector<2x1024xf32>
    %c0_23 = arith.constant 0 : index
    %c0_24 = arith.constant 0 : index
    %38 = vector.load %arg10[%c0_23, %c0_24] : memref<2x1xf32, #tpu.memory_space<vmem>>, vector<2x1xf32>
    %39 = vector.broadcast %38 : vector<2x1xf32> to vector<2x1024xf32>
    %40 = arith.addf %37, %39 : vector<2x1024xf32>
    %41 = math.tanh %40 : vector<2x1024xf32>
    %c0_25 = arith.constant 0 : index
    %c0_26 = arith.constant 0 : index
    %c0_27 = arith.constant 0 : index
    %42 = vector.load %arg11[%c0_25, %c0_26, %c0_27] : memref<1x2x1024xf32, #tpu.memory_space<vmem>>, vector<1x2x1024xf32>
    %43 = vector.shape_cast %42 : vector<1x2x1024xf32> to vector<2x1024xf32>
    %44 = vector.shape_cast %41 : vector<2x1024xf32> to vector<1x2x1024xf32>
    tpu.vector_store %arg11[%c0_25, %c0_26, %c0_27], %44 {strides = array<i32>} : memref<1x2x1024xf32, #tpu.memory_space<vmem>>, vector<1x2x1024xf32>,
    return
  }
  func.func @transform_0(%arg0: i32, %arg1: i32) -> (i32, i32, i32) {
    %c0_i32 = arith.constant 0 : i32
    %c0_i32_0 = arith.constant 0 : i32
    return %arg0, %c0_i32, %arg1 : i32, i32, i32
  }
  func.func @transform_1(%arg0: i32, %arg1: i32) -> (i32, i32) {
    %c0_i32 = arith.constant 0 : i32
    %c0_i32_0 = arith.constant 0 : i32
    %c0_i32_1 = arith.constant 0 : i32
    return %c0_i32, %c0_i32_0 : i32, i32
  }
  func.func @transform_2(%arg0: i32, %arg1: i32) -> (i32, i32) {
    %c0_i32 = arith.constant 0 : i32
    %c0_i32_0 = arith.constant 0 : i32
    %c0_i32_1 = arith.constant 0 : i32
    return %c0_i32, %c0_i32_0 : i32, i32
  }
  func.func @transform_3(%arg0: i32, %arg1: i32) -> (i32, i32) {
    %c0_i32 = arith.constant 0 : i32
    %c0_i32_0 = arith.constant 0 : i32
    %c0_i32_1 = arith.constant 0 : i32
    return %c0_i32, %c0_i32_0 : i32, i32
  }
  func.func @transform_4(%arg0: i32, %arg1: i32) -> (i32, i32) {
    %c0_i32 = arith.constant 0 : i32
    %c0_i32_0 = arith.constant 0 : i32
    %c0_i32_1 = arith.constant 0 : i32
    return %c0_i32, %c0_i32_0 : i32, i32
  }
  func.func @transform_5(%arg0: i32, %arg1: i32) -> (i32, i32) {
    %c0_i32 = arith.constant 0 : i32
    %c0_i32_0 = arith.constant 0 : i32
    %c0_i32_1 = arith.constant 0 : i32
    return %c0_i32, %c0_i32_0 : i32, i32
  }
  func.func @transform_6(%arg0: i32, %arg1: i32) -> (i32, i32) {
    %c0_i32 = arith.constant 0 : i32
    %c0_i32_0 = arith.constant 0 : i32
    %c0_i32_1 = arith.constant 0 : i32
    return %c0_i32, %c0_i32_0 : i32, i32
  }
  func.func @transform_7(%arg0: i32, %arg1: i32) -> (i32, i32) {
    %c0_i32 = arith.constant 0 : i32
    %c0_i32_0 = arith.constant 0 : i32
    %c0_i32_1 = arith.constant 0 : i32
    return %c0_i32, %c0_i32_0 : i32, i32
  }
  func.func @transform_8(%arg0: i32, %arg1: i32) -> (i32, i32) {
    %c0_i32 = arith.constant 0 : i32
    %c0_i32_0 = arith.constant 0 : i32
    %c0_i32_1 = arith.constant 0 : i32
    return %c0_i32, %c0_i32_0 : i32, i32
  }
  func.func @transform_9(%arg0: i32, %arg1: i32) -> (i32, i32, i32) {
    %c0_i32 = arith.constant 0 : i32
    %c0_i32_0 = arith.constant 0 : i32
    return %arg0, %c0_i32, %arg1 : i32, i32, i32
  }
}

</mosaic_0001>

<llo_original>
// kernel: tpu_custom_call.1
$region0: #{tpu_custom_call.1}
  #allocation0 [shape = 'u32[]', space=smem, size = 0x4, offset = 0x4, fixed_abs, tag = 'smem constant byte address 0x4 - core index']
  #allocation1 [shape = 'u32[72,128]{1,0:T(1,128)}', space=vmem, size = 0x9000, scoped, tag = 'internal scratch']
  %s0 = inlined_call_operand.hbm [shape: f32[2,128,1024], index: 0, kind: input, shape index: {}]
  %s1 = inlined_call_operand.vmem [shape: bf16[128,128], index: 1, kind: input, shape index: {}]
  %s2 = inlined_call_operand.vmem [shape: f32[128,1], index: 2, kind: input, shape index: {}]
  %s3 = inlined_call_operand.vmem [shape: bf16[64,128], index: 3, kind: input, shape index: {}]
  %s4 = inlined_call_operand.vmem [shape: f32[64,1], index: 4, kind: input, shape index: {}]
  %s5 = inlined_call_operand.vmem [shape: bf16[32,64], index: 5, kind: input, shape index: {}]
  %s6 = inlined_call_operand.vmem [shape: f32[32,1], index: 6, kind: input, shape index: {}]
  %s7 = inlined_call_operand.vmem [shape: f32[32,2], index: 7, kind: input, shape index: {}]
  %s8 = inlined_call_operand.vmem [shape: f32[2,1], index: 8, kind: input, shape index: {}]
  %s9 = inlined_call_operand.hbm [shape: f32[2,2,1024], index: 9, kind: output, shape index: {}]
  %s10 = sld [smem:[#allocation0]]
  $region73: #{tpu_custom_call.1} parent=0
    _
  %s12 = ssub.s32 1, %s10
  %s13 = scalar_select 0, %s12, %s10
  $region1: #{tpu_custom_call.1} parent=0
    #allocation2 [shape = 'u8[1048576]{0}', space=vmem, size = 0x100000, scoped, tag = 'input window, operand 0']
    #allocation3 [shape = 's32[2]{0}', space=sflag, size = 0x8, scoped, tag = 'scoped memory for tpu_custom_call.1']
    #allocation4 [shape = 's32[2]{0}', space=sflag, size = 0x8, scoped, tag = 'scoped memory for tpu_custom_call.1']
    #allocation5 [shape = 'u8[16384]{0}', space=vmem, size = 0x4000, scoped, tag = 'output window, operand 0']
    %14 = vsyncpa [#allocation3], 0
    %s15 = scalar_lea.sflag [#allocation3], 1
    %16 = vsyncpa %s15, 0
    %17 = vsyncpa [#allocation4], 0
    %s18 = scalar_lea.sflag [#allocation4], 1
    %19 = vsyncpa %s18, 0
    loop: start=0, step=1, limit=4
    $region2: #{tpu_custom_call.1} parent=1 // loop_pre_header
      _
    $region3: #{tpu_custom_call.1} parent=1 // loop_header
      %s21 = sphi 0, %s25
      %p22 = scmp.ge.s32.totalorder %s21, 4
      %s28 = sphi 0, %s40
      %s29 = sphi 0, %s36
      %s30 = sphi 0, %s28
      %s31 = sphi 0, %s29
      %s32 = sphi 0, %s30
      %s33 = sphi 0, %s31
      %s45 = sphi 0, %s47
      %s48 = sphi 0, %s45
      %s49 = sphi 0, %s48
      %s65 = sphi 0, %s49
      %s69 = sphi 0, %s69
      %s71 = sphi 0, %s69
      %s72 = sphi 0, %s71
      %s86 = sphi 0, %s72
      %s90 = sphi 0, %s90
      %s92 = sphi 0, %s90
      %s93 = sphi 0, %s92
      %s107 = sphi 0, %s93
      %s111 = sphi 0, %s111
      %s113 = sphi 0, %s111
      %s114 = sphi 0, %s113
      %s128 = sphi 0, %s114
      %s132 = sphi 0, %s132
      %s134 = sphi 0, %s132
      %s135 = sphi 0, %s134
      %s149 = sphi 0, %s135
      %s153 = sphi 0, %s153
      %s155 = sphi 0, %s153
      %s156 = sphi 0, %s155
      %s170 = sphi 0, %s156
      %s174 = sphi 0, %s174
      %s176 = sphi 0, %s174
      %s177 = sphi 0, %s176
      %s191 = sphi 0, %s177
      %s195 = sphi 0, %s195
      %s197 = sphi 0, %s195
      %s198 = sphi 0, %s197
      %s212 = sphi 0, %s198
      %s216 = sphi 0, %s216
      %s218 = sphi 0, %s216
      %s219 = sphi 0, %s218
      %s233 = sphi 0, %s219
      %s241 = sphi 0, %s243
      %s244 = sphi 0, %s241
      %s245 = sphi 0, %s244
      %s261 = sphi 0, %s245
    $region4: #{tpu_custom_call.1} parent=1 // loop_header_branch
      %24 = sbr.rel (%p22) target = $region8
    $region5: #{tpu_custom_call.1} parent=1 // loop_body
      %s26 = ssub.s32 %s21, 1
      %s27 = ssub.s32 %s21, 2
      %s34 = sadd.s32 1, %s29
      %p35 = scmp.ge.s32.totalorder %s34, 1
      %s36 = scalar_select %p35, 0, %s34
      %s37 = sadd.s32 1, %s28
      %s38 = scalar_select %p35, %s37, %s28
      %p39 = scmp.ge.s32.totalorder %s38, 2
      %s40 = scalar_select %p39, 0, %s38
      %s41 = ssub.s32 %s28, %s40
      %s42 = ssub.s32 %s29, %s36
      %s43 = sor.u32 %s41, %s42
      %p44 = scmp.eq.s32.totalorder %s43, 0
      %s46 = sadd.s32 %s45, 1
      %s47 = scalar_select %p44, %s45, %s46
      %p50 = pneg %p44
      %p51 = scmp.eq.s32.totalorder %s21, 1
      %p52 = por %p50, %p51
      %p53 = scmp.ne.s32.totalorder %s45, %s48
      %p54 = scmp.eq.s32.totalorder %s21, 0
      %p55 = por %p53, %p54
      %p56 = scmp.ne.s32.totalorder %s45, %s48
      %p57 = scmp.eq.s32.totalorder %s26, 1
      %p58 = por %p56, %p57
      %p59 = scmp.ne.s32.totalorder %s48, %s49
      %p60 = scmp.eq.s32.totalorder %s26, 0
      %p61 = por %p59, %p60
      %p62 = scmp.ne.s32.totalorder %s48, %s49
      %p63 = scmp.eq.s32.totalorder %s27, 1
      %p64 = por %p62, %p63
      %p66 = scmp.ne.s32.totalorder %s49, %s65
      %p67 = scmp.eq.s32.totalorder %s27, 0
      %p68 = por %p66, %p67
      %s70 = sadd.s32 %s69, 1
      %p73 = scmp.eq.s32.totalorder %s21, 1
      %p74 = scmp.ne.s32.totalorder %s69, %s71
      %p75 = scmp.eq.s32.totalorder %s21, 0
      %p76 = por %p74, %p75
      %p77 = scmp.ne.s32.totalorder %s69, %s71
      %p78 = scmp.eq.s32.totalorder %s26, 1
      %p79 = por %p77, %p78
      %p80 = scmp.ne.s32.totalorder %s71, %s72
      %p81 = scmp.eq.s32.totalorder %s26, 0
      %p82 = por %p80, %p81
      %p83 = scmp.ne.s32.totalorder %s71, %s72
      %p84 = scmp.eq.s32.totalorder %s27, 1
      %p85 = por %p83, %p84
      %p87 = scmp.ne.s32.totalorder %s72, %s86
      %p88 = scmp.eq.s32.totalorder %s27, 0
      %p89 = por %p87, %p88
      %s91 = sadd.s32 %s90, 1
      %p94 = scmp.eq.s32.totalorder %s21, 1
      %p95 = scmp.ne.s32.totalorder %s90, %s92
      %p96 = scmp.eq.s32.totalorder %s21, 0
      %p97 = por %p95, %p96
      %p98 = scmp.ne.s32.totalorder %s90, %s92
      %p99 = scmp.eq.s32.totalorder %s26, 1
      %p100 = por %p98, %p99
      %p101 = scmp.ne.s32.totalorder %s92, %s93
      %p102 = scmp.eq.s32.totalorder %s26, 0
      %p103 = por %p101, %p102
      %p104 = scmp.ne.s32.totalorder %s92, %s93
      %p105 = scmp.eq.s32.totalorder %s27, 1
      %p106 = por %p104, %p105
      %p108 = scmp.ne.s32.totalorder %s93, %s107
      %p109 = scmp.eq.s32.totalorder %s27, 0
      %p110 = por %p108, %p109
      %s112 = sadd.s32 %s111, 1
      %p115 = scmp.eq.s32.totalorder %s21, 1
      %p116 = scmp.ne.s32.totalorder %s111, %s113
      %p117 = scmp.eq.s32.totalorder %s21, 0
      %p118 = por %p116, %p117
      %p119 = scmp.ne.s32.totalorder %s111, %s113
      %p120 = scmp.eq.s32.totalorder %s26, 1
      %p121 = por %p119, %p120
      %p122 = scmp.ne.s32.totalorder %s113, %s114
      %p123 = scmp.eq.s32.totalorder %s26, 0
      %p124 = por %p122, %p123
      %p125 = scmp.ne.s32.totalorder %s113, %s114
      %p126 = scmp.eq.s32.totalorder %s27, 1
      %p127 = por %p125, %p126
      %p129 = scmp.ne.s32.totalorder %s114, %s128
      %p130 = scmp.eq.s32.totalorder %s27, 0
      %p131 = por %p129, %p130
      %s133 = sadd.s32 %s132, 1
      %p136 = scmp.eq.s32.totalorder %s21, 1
      %p137 = scmp.ne.s32.totalorder %s132, %s134
      %p138 = scmp.eq.s32.totalorder %s21, 0
      %p139 = por %p137, %p138
      %p140 = scmp.ne.s32.totalorder %s132, %s134
      %p141 = scmp.eq.s32.totalorder %s26, 1
      %p142 = por %p140, %p141
      %p143 = scmp.ne.s32.totalorder %s134, %s135
      %p144 = scmp.eq.s32.totalorder %s26, 0
      %p145 = por %p143, %p144
      %p146 = scmp.ne.s32.totalorder %s134, %s135
      %p147 = scmp.eq.s32.totalorder %s27, 1
      %p148 = por %p146, %p147
      %p150 = scmp.ne.s32.totalorder %s135, %s149
      %p151 = scmp.eq.s32.totalorder %s27, 0
      %p152 = por %p150, %p151
      %s154 = sadd.s32 %s153, 1
      %p157 = scmp.eq.s32.totalorder %s21, 1
      %p158 = scmp.ne.s32.totalorder %s153, %s155
      %p159 = scmp.eq.s32.totalorder %s21, 0
      %p160 = por %p158, %p159
      %p161 = scmp.ne.s32.totalorder %s153, %s155
      %p162 = scmp.eq.s32.totalorder %s26, 1
      %p163 = por %p161, %p162
      %p164 = scmp.ne.s32.totalorder %s155, %s156
      %p165 = scmp.eq.s32.totalorder %s26, 0
      %p166 = por %p164, %p165
      %p167 = scmp.ne.s32.totalorder %s155, %s156
      %p168 = scmp.eq.s32.totalorder %s27, 1
      %p169 = por %p167, %p168
      %p171 = scmp.ne.s32.totalorder %s156, %s170
      %p172 = scmp.eq.s32.totalorder %s27, 0
      %p173 = por %p171, %p172
      %s175 = sadd.s32 %s174, 1
      %p178 = scmp.eq.s32.totalorder %s21, 1
      %p179 = scmp.ne.s32.totalorder %s174, %s176
      %p180 = scmp.eq.s32.totalorder %s21, 0
      %p181 = por %p179, %p180
      %p182 = scmp.ne.s32.totalorder %s174, %s176
      %p183 = scmp.eq.s32.totalorder %s26, 1
      %p184 = por %p182, %p183
      %p185 = scmp.ne.s32.totalorder %s176, %s177
      %p186 = scmp.eq.s32.totalorder %s26, 0
      %p187 = por %p185, %p186
      %p188 = scmp.ne.s32.totalorder %s176, %s177
      %p189 = scmp.eq.s32.totalorder %s27, 1
      %p190 = por %p188, %p189
      %p192 = scmp.ne.s32.totalorder %s177, %s191
      %p193 = scmp.eq.s32.totalorder %s27, 0
      %p194 = por %p192, %p193
      %s196 = sadd.s32 %s195, 1
      %p199 = scmp.eq.s32.totalorder %s21, 1
      %p200 = scmp.ne.s32.totalorder %s195, %s197
      %p201 = scmp.eq.s32.totalorder %s21, 0
      %p202 = por %p200, %p201
      %p203 = scmp.ne.s32.totalorder %s195, %s197
      %p204 = scmp.eq.s32.totalorder %s26, 1
      %p205 = por %p203, %p204
      %p206 = scmp.ne.s32.totalorder %s197, %s198
      %p207 = scmp.eq.s32.totalorder %s26, 0
      %p208 = por %p206, %p207
      %p209 = scmp.ne.s32.totalorder %s197, %s198
      %p210 = scmp.eq.s32.totalorder %s27, 1
      %p211 = por %p209, %p210
      %p213 = scmp.ne.s32.totalorder %s198, %s212
      %p214 = scmp.eq.s32.totalorder %s27, 0
      %p215 = por %p213, %p214
      %s217 = sadd.s32 %s216, 1
      %p220 = scmp.eq.s32.totalorder %s21, 1
      %p221 = scmp.ne.s32.totalorder %s216, %s218
      %p222 = scmp.eq.s32.totalorder %s21, 0
      %p223 = por %p221, %p222
      %p224 = scmp.ne.s32.totalorder %s216, %s218
      %p225 = scmp.eq.s32.totalorder %s26, 1
      %p226 = por %p224, %p225
      %p227 = scmp.ne.s32.totalorder %s218, %s219
      %p228 = scmp.eq.s32.totalorder %s26, 0
      %p229 = por %p227, %p228
      %p230 = scmp.ne.s32.totalorder %s218, %s219
      %p231 = scmp.eq.s32.totalorder %s27, 1
      %p232 = por %p230, %p231
      %p234 = scmp.ne.s32.totalorder %s219, %s233
      %p235 = scmp.eq.s32.totalorder %s27, 0
      %p236 = por %p234, %p235
      %s237 = ssub.s32 %s28, %s40
      %s238 = ssub.s32 %s29, %s36
      %s239 = sor.u32 %s237, %s238
      %p240 = scmp.eq.s32.totalorder %s239, 0
      %s242 = sadd.s32 %s241, 1
      %s243 = scalar_select %p240, %s241, %s242
      %p246 = pneg %p240
      %p247 = scmp.eq.s32.totalorder %s21, 1
      %p248 = por %p246, %p247
      %p249 = scmp.ne.s32.totalorder %s241, %s244
      %p250 = scmp.eq.s32.totalorder %s21, 0
      %p251 = por %p249, %p250
      %p252 = scmp.ne.s32.totalorder %s241, %s244
      %p253 = scmp.eq.s32.totalorder %s26, 1
      %p254 = por %p252, %p253
      %p255 = scmp.ne.s32.totalorder %s244, %s245
      %p256 = scmp.eq.s32.totalorder %s26, 0
      %p257 = por %p255, %p256
      %p258 = scmp.ne.s32.totalorder %s244, %s245
      %p259 = scmp.eq.s32.totalorder %s27, 1
      %p260 = por %p258, %p259
      %p262 = scmp.ne.s32.totalorder %s245, %s261
      %p263 = scmp.eq.s32.totalorder %s27, 0
      %p264 = por %p262, %p263
      %p265 = scmp.le.s32.totalorder 1, %s21
      %p266 = scmp.lt.s32.totalorder %s21, 3
      %p267 = pnand %p265, %p266
      %p268 = pneg %p267
      // Predicated region
      $region9: #{tpu_custom_call.1} parent=5 // pred_check
        _
      $region10: #{tpu_custom_call.1} parent=5 // pred_check_branch
        %270 = sbr.rel (%p267) target = $region12
      $region11: #{tpu_custom_call.1} parent=5 // pred_region
        %s271 = ssub.s32 %s21, 1
        // Predicated region
        $region13: #{tpu_custom_call.1} parent=11 // pred_check
          %p272 = pneg %p82
        $region14: #{tpu_custom_call.1} parent=11 // pred_check_branch
          %274 = sbr.rel (%p272) target = $region16
        $region15: #{tpu_custom_call.1} parent=11 // pred_region
          _
        $region16: #{tpu_custom_call.1} parent=11 // pred_fallthru
          _
        // Predicated region
        $region17: #{tpu_custom_call.1} parent=11 // pred_check
          %p275 = pneg %p103
        $region18: #{tpu_custom_call.1} parent=11 // pred_check_branch
          %277 = sbr.rel (%p275) target = $region20
        $region19: #{tpu_custom_call.1} parent=11 // pred_region
          _
        $region20: #{tpu_custom_call.1} parent=11 // pred_fallthru
          _
        // Predicated region
        $region21: #{tpu_custom_call.1} parent=11 // pred_check
          %p278 = pneg %p124
        $region22: #{tpu_custom_call.1} parent=11 // pred_check_branch
          %280 = sbr.rel (%p278) target = $region24
        $region23: #{tpu_custom_call.1} parent=11 // pred_region
          _
        $region24: #{tpu_custom_call.1} parent=11 // pred_fallthru
          _
        // Predicated region
        $region25: #{tpu_custom_call.1} parent=11 // pred_check
          %p281 = pneg %p145
        $region26: #{tpu_custom_call.1} parent=11 // pred_check_branch
          %283 = sbr.rel (%p281) target = $region28
        $region27: #{tpu_custom_call.1} parent=11 // pred_region
          _
        $region28: #{tpu_custom_call.1} parent=11 // pred_fallthru
          _
        // Predicated region
        $region29: #{tpu_custom_call.1} parent=11 // pred_check
          %p284 = pneg %p166
        $region30: #{tpu_custom_call.1} parent=11 // pred_check_branch
          %286 = sbr.rel (%p284) target = $region32
        $region31: #{tpu_custom_call.1} parent=11 // pred_region
          _
        $region32: #{tpu_custom_call.1} parent=11 // pred_fallthru
          _
        // Predicated region
        $region33: #{tpu_custom_call.1} parent=11 // pred_check
          %p287 = pneg %p187
        $region34: #{tpu_custom_call.1} parent=11 // pred_check_branch
          %289 = sbr.rel (%p287) target = $region36
        $region35: #{tpu_custom_call.1} parent=11 // pred_region
          _
        $region36: #{tpu_custom_call.1} parent=11 // pred_fallthru
          _
        // Predicated region
        $region37: #{tpu_custom_call.1} parent=11 // pred_check
          %p290 = pneg %p208
        $region38: #{tpu_custom_call.1} parent=11 // pred_check_branch
          %292 = sbr.rel (%p290) target = $region40
        $region39: #{tpu_custom_call.1} parent=11 // pred_region
          _
        $region40: #{tpu_custom_call.1} parent=11 // pred_fallthru
          _
        // Predicated region
        $region41: #{tpu_custom_call.1} parent=11 // pred_check
          %p293 = pneg %p229
        $region42: #{tpu_custom_call.1} parent=11 // pred_check_branch
          %295 = sbr.rel (%p293) target = $region44
        $region43: #{tpu_custom_call.1} parent=11 // pred_region
          _
        $region44: #{tpu_custom_call.1} parent=11 // pred_fallthru
          _
      $region12: #{tpu_custom_call.1} parent=5 // pred_fallthru
        _
      %p296 = scmp.lt.s32.totalorder %s21, 2
      // Predicated region
      $region45: #{tpu_custom_call.1} parent=5 // pred_check
        %p297 = pneg %p296
      $region46: #{tpu_custom_call.1} parent=5 // pred_check_branch
        %299 = sbr.rel (%p297) target = $region48
      $region47: #{tpu_custom_call.1} parent=5 // pred_region
        // Predicated region
        $region49: #{tpu_custom_call.1} parent=47 // pred_check
          %p300 = pneg %p55
        $region50: #{tpu_custom_call.1} parent=47 // pred_check_branch
          %302 = sbr.rel (%p300) target = $region52
        $region51: #{tpu_custom_call.1} parent=47 // pred_region
          %s303 = sand.u32 %s45, 1
          %s304 = scalar_lea.sflag [#allocation3], %s303
          %s305 = sand.u32 %s45, 1
          %s306 = smul.addr %s305, 1024
          %s307 = scalar_lea.vmem [#allocation2], %s306
          %s308 = smul.u32 8, %s29
          %310 = vsyncadd %s304, 0
          %s311 = smul.addr %s28, 128
          %s312 = sadd.s32 %s308, %s311
          %s313 = smul.addr %s312, 8
          %s314 = scalar_lea.hbm %s0, %s313
          %s315 = sshll.u32 %s314, 4
          %s316 = int_to_ptr.hbm [resolvable:$true] %s315
          %s317 = sshll.u32 %s307, 4
          %s318 = int_to_ptr.vmem [resolvable:$true] %s317
          %323 = dma.hbm_to_vmem [thread:$0]  %s316, 16384, %s318, %s304, 1024, 1024, 64
        $region52: #{tpu_custom_call.1} parent=47 // pred_fallthru
          _
      $region48: #{tpu_custom_call.1} parent=5 // pred_fallthru
        _
      %p324 = scmp.le.s32.totalorder 1, %s21
      %p325 = scmp.lt.s32.totalorder %s21, 3
      %p326 = pnand %p324, %p325
      %p327 = pneg %p326
      // Predicated region
      $region53: #{tpu_custom_call.1} parent=5 // pred_check
        _
      $region54: #{tpu_custom_call.1} parent=5 // pred_check_branch
        %329 = sbr.rel (%p326) target = $region56
      $region55: #{tpu_custom_call.1} parent=5 // pred_region
        %s330 = ssub.s32 %s21, 1
        %s331 = sand.u32 %s48, 1
        %s332 = scalar_lea.sflag [#allocation3], %s331
        %s333 = sand.u32 %s48, 1
        %s334 = smul.addr %s333, 1024
        %s335 = scalar_lea.vmem [#allocation2], %s334
        // Predicated region
        $region57: #{tpu_custom_call.1} parent=55 // pred_check
          %p336 = pneg %p61
        $region58: #{tpu_custom_call.1} parent=55 // pred_check_branch
          %338 = sbr.rel (%p336) target = $region60
        $region59: #{tpu_custom_call.1} parent=55 // pred_region
          %340 = dma.done %s332, 16384
        $region60: #{tpu_custom_call.1} parent=55 // pred_fallthru
          _
        %s341 = sand.u32 %s48, 1
        %s342 = scalar_lea.sflag [#allocation3], %s341
        %s343 = sand.u32 %s48, 1
        %s344 = smul.addr %s343, 1024
        %s345 = scalar_lea.vmem [#allocation2], %s344
        %p346 = pneg %p61
        %p347 = pneg %p58
        %p348 = pneg %p82
        %p349 = pneg %p79
        %p350 = pneg %p103
        %p351 = pneg %p100
        %p352 = pneg %p124
        %p353 = pneg %p121
        %p354 = pneg %p145
        %p355 = pneg %p142
        %p356 = pneg %p166
        %p357 = pneg %p163
        %p358 = pneg %p187
        %p359 = pneg %p184
        %p360 = pneg %p208
        %p361 = pneg %p205
        %p362 = pneg %p229
        %p363 = pneg %p226
        %p364 = pneg %p257
        %p365 = pneg %p254
        %s366 = sand.u32 %s244, 1
        %s367 = scalar_lea.sflag [#allocation4], %s366
        %s368 = sand.u32 %s244, 1
        %s369 = smul.addr %s368, 16
        %s370 = scalar_lea.vmem [#allocation5], %s369
        %s371 = smul.u32 8, %s31
        %s372 = smul.u32 8, %s31
        %v374 = vld [vmem:[%s335] sm:$0xff]
        %v375 = vld [vmem:[%s335 + $0x8] sm:$0xff]
        %v376 = vld [vmem:[%s335 + $0x10] sm:$0xff]
        %v377 = vld [vmem:[%s335 + $0x18] sm:$0xff]
        %v378 = vld [vmem:[%s335 + $0x20] sm:$0xff]
        %v379 = vld [vmem:[%s335 + $0x28] sm:$0xff]
        %v380 = vld [vmem:[%s335 + $0x30] sm:$0xff]
        %v381 = vld [vmem:[%s335 + $0x38] sm:$0xff]
        %v382 = vld [vmem:[%s335 + $0x40] sm:$0xff]
        %v383 = vld [vmem:[%s335 + $0x48] sm:$0xff]
        %v384 = vld [vmem:[%s335 + $0x50] sm:$0xff]
        %v385 = vld [vmem:[%s335 + $0x58] sm:$0xff]
        %v386 = vld [vmem:[%s335 + $0x60] sm:$0xff]
        %v387 = vld [vmem:[%s335 + $0x68] sm:$0xff]
        %v388 = vld [vmem:[%s335 + $0x70] sm:$0xff]
        %v389 = vld [vmem:[%s335 + $0x78] sm:$0xff]
        %v390 = vld [vmem:[%s335 + $0x80] sm:$0xff]
        %v391 = vld [vmem:[%s335 + $0x88] sm:$0xff]
        %v392 = vld [vmem:[%s335 + $0x90] sm:$0xff]
        %v393 = vld [vmem:[%s335 + $0x98] sm:$0xff]
        %v394 = vld [vmem:[%s335 + $0xa0] sm:$0xff]
        %v395 = vld [vmem:[%s335 + $0xa8] sm:$0xff]
        %v396 = vld [vmem:[%s335 + $0xb0] sm:$0xff]
        %v397 = vld [vmem:[%s335 + $0xb8] sm:$0xff]
        %v398 = vld [vmem:[%s335 + $0xc0] sm:$0xff]
        %v399 = vld [vmem:[%s335 + $0xc8] sm:$0xff]
        %v400 = vld [vmem:[%s335 + $0xd0] sm:$0xff]
        %v401 = vld [vmem:[%s335 + $0xd8] sm:$0xff]
        %v402 = vld [vmem:[%s335 + $0xe0] sm:$0xff]
        %v403 = vld [vmem:[%s335 + $0xe8] sm:$0xff]
        %v404 = vld [vmem:[%s335 + $0xf0] sm:$0xff]
        %v405 = vld [vmem:[%s335 + $0xf8] sm:$0xff]
        %v406 = vld [vmem:[%s335 + $0x100] sm:$0xff]
        %v407 = vld [vmem:[%s335 + $0x108] sm:$0xff]
        %v408 = vld [vmem:[%s335 + $0x110] sm:$0xff]
        %v409 = vld [vmem:[%s335 + $0x118] sm:$0xff]
        %v410 = vld [vmem:[%s335 + $0x120] sm:$0xff]
        %v411 = vld [vmem:[%s335 + $0x128] sm:$0xff]
        %v412 = vld [vmem:[%s335 + $0x130] sm:$0xff]
        %v413 = vld [vmem:[%s335 + $0x138] sm:$0xff]
        %v414 = vld [vmem:[%s335 + $0x140] sm:$0xff]
        %v415 = vld [vmem:[%s335 + $0x148] sm:$0xff]
        %v416 = vld [vmem:[%s335 + $0x150] sm:$0xff]
        %v417 = vld [vmem:[%s335 + $0x158] sm:$0xff]
        %v418 = vld [vmem:[%s335 + $0x160] sm:$0xff]
        %v419 = vld [vmem:[%s335 + $0x168] sm:$0xff]
        %v420 = vld [vmem:[%s335 + $0x170] sm:$0xff]
        %v421 = vld [vmem:[%s335 + $0x178] sm:$0xff]
        %v422 = vld [vmem:[%s335 + $0x180] sm:$0xff]
        %v423 = vld [vmem:[%s335 + $0x188] sm:$0xff]
        %v424 = vld [vmem:[%s335 + $0x190] sm:$0xff]
        %v425 = vld [vmem:[%s335 + $0x198] sm:$0xff]
        %v426 = vld [vmem:[%s335 + $0x1a0] sm:$0xff]
        %v427 = vld [vmem:[%s335 + $0x1a8] sm:$0xff]
        %v428 = vld [vmem:[%s335 + $0x1b0] sm:$0xff]
        %v429 = vld [vmem:[%s335 + $0x1b8] sm:$0xff]
        %v430 = vld [vmem:[%s335 + $0x1c0] sm:$0xff]
        %v431 = vld [vmem:[%s335 + $0x1c8] sm:$0xff]
        %v432 = vld [vmem:[%s335 + $0x1d0] sm:$0xff]
        %v433 = vld [vmem:[%s335 + $0x1d8] sm:$0xff]
        %v434 = vld [vmem:[%s335 + $0x1e0] sm:$0xff]
        %v435 = vld [vmem:[%s335 + $0x1e8] sm:$0xff]
        %v436 = vld [vmem:[%s335 + $0x1f0] sm:$0xff]
        %v437 = vld [vmem:[%s335 + $0x1f8] sm:$0xff]
        %v438 = vld [vmem:[%s335 + $0x200] sm:$0xff]
        %v439 = vld [vmem:[%s335 + $0x208] sm:$0xff]
        %v440 = vld [vmem:[%s335 + $0x210] sm:$0xff]
        %v441 = vld [vmem:[%s335 + $0x218] sm:$0xff]
        %v442 = vld [vmem:[%s335 + $0x220] sm:$0xff]
        %v443 = vld [vmem:[%s335 + $0x228] sm:$0xff]
        %v444 = vld [vmem:[%s335 + $0x230] sm:$0xff]
        %v445 = vld [vmem:[%s335 + $0x238] sm:$0xff]
        %v446 = vld [vmem:[%s335 + $0x240] sm:$0xff]
        %v447 = vld [vmem:[%s335 + $0x248] sm:$0xff]
        %v448 = vld [vmem:[%s335 + $0x250] sm:$0xff]
        %v449 = vld [vmem:[%s335 + $0x258] sm:$0xff]
        %v450 = vld [vmem:[%s335 + $0x260] sm:$0xff]
        %v451 = vld [vmem:[%s335 + $0x268] sm:$0xff]
        %v452 = vld [vmem:[%s335 + $0x270] sm:$0xff]
        %v453 = vld [vmem:[%s335 + $0x278] sm:$0xff]
        %v454 = vld [vmem:[%s335 + $0x280] sm:$0xff]
        %v455 = vld [vmem:[%s335 + $0x288] sm:$0xff]
        %v456 = vld [vmem:[%s335 + $0x290] sm:$0xff]
        %v457 = vld [vmem:[%s335 + $0x298] sm:$0xff]
        %v458 = vld [vmem:[%s335 + $0x2a0] sm:$0xff]
        %v459 = vld [vmem:[%s335 + $0x2a8] sm:$0xff]
        %v460 = vld [vmem:[%s335 + $0x2b0] sm:$0xff]
        %v461 = vld [vmem:[%s335 + $0x2b8] sm:$0xff]
        %v462 = vld [vmem:[%s335 + $0x2c0] sm:$0xff]
        %v463 = vld [vmem:[%s335 + $0x2c8] sm:$0xff]
        %v464 = vld [vmem:[%s335 + $0x2d0] sm:$0xff]
        %v465 = vld [vmem:[%s335 + $0x2d8] sm:$0xff]
        %v466 = vld [vmem:[%s335 + $0x2e0] sm:$0xff]
        %v467 = vld [vmem:[%s335 + $0x2e8] sm:$0xff]
        %v468 = vld [vmem:[%s335 + $0x2f0] sm:$0xff]
        %v469 = vld [vmem:[%s335 + $0x2f8] sm:$0xff]
        %v470 = vld [vmem:[%s335 + $0x300] sm:$0xff]
        %v471 = vld [vmem:[%s335 + $0x308] sm:$0xff]
        %v472 = vld [vmem:[%s335 + $0x310] sm:$0xff]
        %v473 = vld [vmem:[%s335 + $0x318] sm:$0xff]
        %v474 = vld [vmem:[%s335 + $0x320] sm:$0xff]
        %v475 = vld [vmem:[%s335 + $0x328] sm:$0xff]
        %v476 = vld [vmem:[%s335 + $0x330] sm:$0xff]
        %v477 = vld [vmem:[%s335 + $0x338] sm:$0xff]
        %v478 = vld [vmem:[%s335 + $0x340] sm:$0xff]
        %v479 = vld [vmem:[%s335 + $0x348] sm:$0xff]
        %v480 = vld [vmem:[%s335 + $0x350] sm:$0xff]
        %v481 = vld [vmem:[%s335 + $0x358] sm:$0xff]
        %v482 = vld [vmem:[%s335 + $0x360] sm:$0xff]
        %v483 = vld [vmem:[%s335 + $0x368] sm:$0xff]
        %v484 = vld [vmem:[%s335 + $0x370] sm:$0xff]
        %v485 = vld [vmem:[%s335 + $0x378] sm:$0xff]
        %v486 = vld [vmem:[%s335 + $0x380] sm:$0xff]
        %v487 = vld [vmem:[%s335 + $0x388] sm:$0xff]
        %v488 = vld [vmem:[%s335 + $0x390] sm:$0xff]
        %v489 = vld [vmem:[%s335 + $0x398] sm:$0xff]
        %v490 = vld [vmem:[%s335 + $0x3a0] sm:$0xff]
        %v491 = vld [vmem:[%s335 + $0x3a8] sm:$0xff]
        %v492 = vld [vmem:[%s335 + $0x3b0] sm:$0xff]
        %v493 = vld [vmem:[%s335 + $0x3b8] sm:$0xff]
        %v494 = vld [vmem:[%s335 + $0x3c0] sm:$0xff]
        %v495 = vld [vmem:[%s335 + $0x3c8] sm:$0xff]
        %v496 = vld [vmem:[%s335 + $0x3d0] sm:$0xff]
        %v497 = vld [vmem:[%s335 + $0x3d8] sm:$0xff]
        %v498 = vld [vmem:[%s335 + $0x3e0] sm:$0xff]
        %v499 = vld [vmem:[%s335 + $0x3e8] sm:$0xff]
        %v500 = vld [vmem:[%s335 + $0x3f0] sm:$0xff]
        %v501 = vld [vmem:[%s335 + $0x3f8] sm:$0xff]
        %v502 = vpack.c.bf16 %v382, %v374
        %v503 = vpack.c.bf16 %v383, %v375
        %v504 = vpack.c.bf16 %v384, %v376
        %v505 = vpack.c.bf16 %v385, %v377
        %v506 = vpack.c.bf16 %v386, %v378
        %v507 = vpack.c.bf16 %v387, %v379
        %v508 = vpack.c.bf16 %v388, %v380
        %v509 = vpack.c.bf16 %v389, %v381
        %v510 = vpack.c.bf16 %v398, %v390
        %v511 = vpack.c.bf16 %v399, %v391
        %v512 = vpack.c.bf16 %v400, %v392
        %v513 = vpack.c.bf16 %v401, %v393
        %v514 = vpack.c.bf16 %v402, %v394
        %v515 = vpack.c.bf16 %v403, %v395
        %v516 = vpack.c.bf16 %v404, %v396
        %v517 = vpack.c.bf16 %v405, %v397
        %v518 = vpack.c.bf16 %v414, %v406
        %v519 = vpack.c.bf16 %v415, %v407
        %v520 = vpack.c.bf16 %v416, %v408
        %v521 = vpack.c.bf16 %v417, %v409
        %v522 = vpack.c.bf16 %v418, %v410
        %v523 = vpack.c.bf16 %v419, %v411
        %v524 = vpack.c.bf16 %v420, %v412
        %v525 = vpack.c.bf16 %v421, %v413
        %v526 = vpack.c.bf16 %v430, %v422
        %v527 = vpack.c.bf16 %v431, %v423
        %v528 = vpack.c.bf16 %v432, %v424
        %v529 = vpack.c.bf16 %v433, %v425
        %v530 = vpack.c.bf16 %v434, %v426
        %v531 = vpack.c.bf16 %v435, %v427
        %v532 = vpack.c.bf16 %v436, %v428
        %v533 = vpack.c.bf16 %v437, %v429
        %v534 = vpack.c.bf16 %v446, %v438
        %v535 = vpack.c.bf16 %v447, %v439
        %v536 = vpack.c.bf16 %v448, %v440
        %v537 = vpack.c.bf16 %v449, %v441
        %v538 = vpack.c.bf16 %v450, %v442
        %v539 = vpack.c.bf16 %v451, %v443
        %v540 = vpack.c.bf16 %v452, %v444
        %v541 = vpack.c.bf16 %v453, %v445
        %v542 = vpack.c.bf16 %v462, %v454
        %v543 = vpack.c.bf16 %v463, %v455
        %v544 = vpack.c.bf16 %v464, %v456
        %v545 = vpack.c.bf16 %v465, %v457
        %v546 = vpack.c.bf16 %v466, %v458
        %v547 = vpack.c.bf16 %v467, %v459
        %v548 = vpack.c.bf16 %v468, %v460
        %v549 = vpack.c.bf16 %v469, %v461
        %v550 = vpack.c.bf16 %v478, %v470
        %v551 = vpack.c.bf16 %v479, %v471
        %v552 = vpack.c.bf16 %v480, %v472
        %v553 = vpack.c.bf16 %v481, %v473
        %v554 = vpack.c.bf16 %v482, %v474
        %v555 = vpack.c.bf16 %v483, %v475
        %v556 = vpack.c.bf16 %v484, %v476
        %v557 = vpack.c.bf16 %v485, %v477
        %v558 = vpack.c.bf16 %v494, %v486
        %v559 = vpack.c.bf16 %v495, %v487
        %v560 = vpack.c.bf16 %v496, %v488
        %v561 = vpack.c.bf16 %v497, %v489
        %v562 = vpack.c.bf16 %v498, %v490
        %v563 = vpack.c.bf16 %v499, %v491
        %v564 = vpack.c.bf16 %v500, %v492
        %v565 = vpack.c.bf16 %v501, %v493
        %v566 = vld [vmem:[%s1] sm:$0xf]
        %v567 = vld [vmem:[%s1 + $0x4] sm:$0xf]
        %v568 = vld [vmem:[%s1 + $0x8] sm:$0xf]
        %v569 = vld [vmem:[%s1 + $0xc] sm:$0xf]
        %v570 = vld [vmem:[%s1 + $0x10] sm:$0xf]
        %v571 = vld [vmem:[%s1 + $0x14] sm:$0xf]
        %v572 = vld [vmem:[%s1 + $0x18] sm:$0xf]
        %v573 = vld [vmem:[%s1 + $0x1c] sm:$0xf]
        %v574 = vld [vmem:[%s1 + $0x20] sm:$0xf]
        %v575 = vld [vmem:[%s1 + $0x24] sm:$0xf]
        %v576 = vld [vmem:[%s1 + $0x28] sm:$0xf]
        %v577 = vld [vmem:[%s1 + $0x2c] sm:$0xf]
        %v578 = vld [vmem:[%s1 + $0x30] sm:$0xf]
        %v579 = vld [vmem:[%s1 + $0x34] sm:$0xf]
        %v580 = vld [vmem:[%s1 + $0x38] sm:$0xf]
        %v581 = vld [vmem:[%s1 + $0x3c] sm:$0xf]
        %v582 = vld [vmem:[%s2] sm:$0xff]
        %v583 = vld [vmem:[%s2 + $0x8] sm:$0xff]
        %v584 = vld [vmem:[%s2 + $0x10] sm:$0xff]
        %v585 = vld [vmem:[%s2 + $0x18] sm:$0xff]
        %v586 = vld [vmem:[%s2 + $0x20] sm:$0xff]
        %v587 = vld [vmem:[%s2 + $0x28] sm:$0xff]
        %v588 = vld [vmem:[%s2 + $0x30] sm:$0xff]
        %v589 = vld [vmem:[%s2 + $0x38] sm:$0xff]
        %v590 = vld [vmem:[%s2 + $0x40] sm:$0xff]
        %v591 = vld [vmem:[%s2 + $0x48] sm:$0xff]
        %v592 = vld [vmem:[%s2 + $0x50] sm:$0xff]
        %v593 = vld [vmem:[%s2 + $0x58] sm:$0xff]
        %v594 = vld [vmem:[%s2 + $0x60] sm:$0xff]
        %v595 = vld [vmem:[%s2 + $0x68] sm:$0xff]
        %v596 = vld [vmem:[%s2 + $0x70] sm:$0xff]
        %v597 = vld [vmem:[%s2 + $0x78] sm:$0xff]
        %599 = vset.pattern.permute.xlu0 0
        %600 = vperm.xlu0 %599, %v582
        %v601 = vpop.permute.xlu0 %600
        %604 = vset.pattern.permute.xlu0 0
        %605 = vperm.xlu0 %604, %v583
        %v606 = vpop.permute.xlu0 %605
        %609 = vset.pattern.permute.xlu0 0
        %610 = vperm.xlu0 %609, %v584
        %v611 = vpop.permute.xlu0 %610
        %614 = vset.pattern.permute.xlu0 0
        %615 = vperm.xlu0 %614, %v585
        %v616 = vpop.permute.xlu0 %615
        %619 = vset.pattern.permute.xlu0 0
        %620 = vperm.xlu0 %619, %v586
        %v621 = vpop.permute.xlu0 %620
        %624 = vset.pattern.permute.xlu0 0
        %625 = vperm.xlu0 %624, %v587
        %v626 = vpop.permute.xlu0 %625
        %629 = vset.pattern.permute.xlu0 0
        %630 = vperm.xlu0 %629, %v588
        %v631 = vpop.permute.xlu0 %630
        %634 = vset.pattern.permute.xlu0 0
        %635 = vperm.xlu0 %634, %v589
        %v636 = vpop.permute.xlu0 %635
        %639 = vset.pattern.permute.xlu0 0
        %640 = vperm.xlu0 %639, %v590
        %v641 = vpop.permute.xlu0 %640
        %644 = vset.pattern.permute.xlu0 0
        %645 = vperm.xlu0 %644, %v591
        %v646 = vpop.permute.xlu0 %645
        %649 = vset.pattern.permute.xlu0 0
        %650 = vperm.xlu0 %649, %v592
        %v651 = vpop.permute.xlu0 %650
        %654 = vset.pattern.permute.xlu0 0
        %655 = vperm.xlu0 %654, %v593
        %v656 = vpop.permute.xlu0 %655
        %659 = vset.pattern.permute.xlu0 0
        %660 = vperm.xlu0 %659, %v594
        %v661 = vpop.permute.xlu0 %660
        %664 = vset.pattern.permute.xlu0 0
        %665 = vperm.xlu0 %664, %v595
        %v666 = vpop.permute.xlu0 %665
        %669 = vset.pattern.permute.xlu0 0
        %670 = vperm.xlu0 %669, %v596
        %v671 = vpop.permute.xlu0 %670
        %674 = vset.pattern.permute.xlu0 0
        %675 = vperm.xlu0 %674, %v597
        %v676 = vpop.permute.xlu0 %675
        %v694 = vunpack.c.l.b16 %v566
        %v695 = vunpack.c.l.b16 %v567
        %v696 = vunpack.c.l.b16 %v568
        %v697 = vunpack.c.l.b16 %v569
        %v698 = vunpack.c.l.b16 %v570
        %v699 = vunpack.c.l.b16 %v571
        %v700 = vunpack.c.l.b16 %v572
        %v701 = vunpack.c.l.b16 %v573
        %v702 = vunpack.c.l.b16 %v574
        %v703 = vunpack.c.l.b16 %v575
        %v704 = vunpack.c.l.b16 %v576
        %v705 = vunpack.c.l.b16 %v577
        %v706 = vunpack.c.l.b16 %v578
        %v707 = vunpack.c.l.b16 %v579
        %v708 = vunpack.c.l.b16 %v580
        %v709 = vunpack.c.l.b16 %v581
        %v710 = vpack.c.b16 %v695, %v694
        %v711 = vpack.c.b16 %v697, %v696
        %v712 = vpack.c.b16 %v699, %v698
        %v713 = vpack.c.b16 %v701, %v700
        %v714 = vpack.c.b16 %v703, %v702
        %v715 = vpack.c.b16 %v705, %v704
        %v716 = vpack.c.b16 %v707, %v706
        %v717 = vpack.c.b16 %v709, %v708
        %726 = vmatpush.bf16.msra.mxu0 %v558
        %727 = vmatpush.bf16.msra.mxu0 %v550
        %728 = vmatpush.bf16.msra.mxu0 %v542
        %729 = vmatpush.bf16.msra.mxu0 %v534
        %730 = vmatpush.bf16.msra.mxu0 %v526
        %731 = vmatpush.bf16.msra.mxu0 %v518
        %732 = vmatpush.bf16.msra.mxu0 %v510
        %733 = vmatpush.bf16.msra.mxu0 %v502
        %734 = vmatmul.bf16.gmra.mxu0 %v710
        %v735 = vpop.f32.mrf.mxu0
        %v736 = vadd.f32 %v601, %v735
        %v737 = vpop.f32.mrf.mxu0
        %v738 = vadd.f32 %v606, %v737
        %739 = vmatmul.bf16.gmra.mxu0 %v711
        %v740 = vpop.f32.mrf.mxu0
        %v741 = vadd.f32 %v611, %v740
        %v742 = vpop.f32.mrf.mxu0
        %v743 = vadd.f32 %v616, %v742
        %744 = vmatmul.bf16.gmra.mxu0 %v712
        %v745 = vpop.f32.mrf.mxu0
        %v746 = vadd.f32 %v621, %v745
        %v747 = vpop.f32.mrf.mxu0
        %v748 = vadd.f32 %v626, %v747
        %749 = vmatmul.bf16.gmra.mxu0 %v713
        %v750 = vpop.f32.mrf.mxu0
        %v751 = vadd.f32 %v631, %v750
        %v752 = vpop.f32.mrf.mxu0
        %v753 = vadd.f32 %v636, %v752
        %754 = vmatmul.bf16.gmra.mxu0 %v714
        %v755 = vpop.f32.mrf.mxu0
        %v756 = vadd.f32 %v641, %v755
        %v757 = vpop.f32.mrf.mxu0
        %v758 = vadd.f32 %v646, %v757
        %759 = vmatmul.bf16.gmra.mxu0 %v715
        %v760 = vpop.f32.mrf.mxu0
        %v761 = vadd.f32 %v651, %v760
        %v762 = vpop.f32.mrf.mxu0
        %v763 = vadd.f32 %v656, %v762
        %764 = vmatmul.bf16.gmra.mxu0 %v716
        %v765 = vpop.f32.mrf.mxu0
        %v766 = vadd.f32 %v661, %v765
        %v767 = vpop.f32.mrf.mxu0
        %v768 = vadd.f32 %v666, %v767
        %769 = vmatmul.bf16.gmra.mxu0 %v717
        %v770 = vpop.f32.mrf.mxu0
        %v771 = vadd.f32 %v671, %v770
        %v772 = vpop.f32.mrf.mxu0
        %v773 = vadd.f32 %v676, %v772
        %774 = vdwg.mxu0
        %775 = vmatpush.bf16.msra.mxu0 %v559
        %776 = vmatpush.bf16.msra.mxu0 %v551
        %777 = vmatpush.bf16.msra.mxu0 %v543
        %778 = vmatpush.bf16.msra.mxu0 %v535
        %779 = vmatpush.bf16.msra.mxu0 %v527
        %780 = vmatpush.bf16.msra.mxu0 %v519
        %781 = vmatpush.bf16.msra.mxu0 %v511
        %782 = vmatpush.bf16.msra.mxu0 %v503
        %783 = vmatmul.bf16.gmra.mxu0 %v710
        %v784 = vpop.f32.mrf.mxu0
        %v785 = vadd.f32 %v601, %v784
        %v786 = vpop.f32.mrf.mxu0
        %v787 = vadd.f32 %v606, %v786
        %788 = vmatmul.bf16.gmra.mxu0 %v711
        %v789 = vpop.f32.mrf.mxu0
        %v790 = vadd.f32 %v611, %v789
        %v791 = vpop.f32.mrf.mxu0
        %v792 = vadd.f32 %v616, %v791
        %793 = vmatmul.bf16.gmra.mxu0 %v712
        %v794 = vpop.f32.mrf.mxu0
        %v795 = vadd.f32 %v621, %v794
        %v796 = vpop.f32.mrf.mxu0
        %v797 = vadd.f32 %v626, %v796
        %798 = vmatmul.bf16.gmra.mxu0 %v713
        %v799 = vpop.f32.mrf.mxu0
        %v800 = vadd.f32 %v631, %v799
        %v801 = vpop.f32.mrf.mxu0
        %v802 = vadd.f32 %v636, %v801
        %803 = vmatmul.bf16.gmra.mxu0 %v714
        %v804 = vpop.f32.mrf.mxu0
        %v805 = vadd.f32 %v641, %v804
        %v806 = vpop.f32.mrf.mxu0
        %v807 = vadd.f32 %v646, %v806
        %808 = vmatmul.bf16.gmra.mxu0 %v715
        %v809 = vpop.f32.mrf.mxu0
        %v810 = vadd.f32 %v651, %v809
        %v811 = vpop.f32.mrf.mxu0
        %v812 = vadd.f32 %v656, %v811
        %813 = vmatmul.bf16.gmra.mxu0 %v716
        %v814 = vpop.f32.mrf.mxu0
        %v815 = vadd.f32 %v661, %v814
        %v816 = vpop.f32.mrf.mxu0
        %v817 = vadd.f32 %v666, %v816
        %818 = vmatmul.bf16.gmra.mxu0 %v717
        %v819 = vpop.f32.mrf.mxu0
        %v820 = vadd.f32 %v671, %v819
        %v821 = vpop.f32.mrf.mxu0
        %v822 = vadd.f32 %v676, %v821
        %823 = vdwg.mxu0
        %824 = vmatpush.bf16.msra.mxu0 %v560
        %825 = vmatpush.bf16.msra.mxu0 %v552
        %826 = vmatpush.bf16.msra.mxu0 %v544
        %827 = vmatpush.bf16.msra.mxu0 %v536
        %828 = vmatpush.bf16.msra.mxu0 %v528
        %829 = vmatpush.bf16.msra.mxu0 %v520
        %830 = vmatpush.bf16.msra.mxu0 %v512
        %831 = vmatpush.bf16.msra.mxu0 %v504
        %832 = vmatmul.bf16.gmra.mxu0 %v710
        %v833 = vpop.f32.mrf.mxu0
        %v834 = vadd.f32 %v601, %v833
        %v835 = vpop.f32.mrf.mxu0
        %v836 = vadd.f32 %v606, %v835
        %837 = vmatmul.bf16.gmra.mxu0 %v711
        %v838 = vpop.f32.mrf.mxu0
        %v839 = vadd.f32 %v611, %v838
        %v840 = vpop.f32.mrf.mxu0
        %v841 = vadd.f32 %v616, %v840
        %842 = vmatmul.bf16.gmra.mxu0 %v712
        %v843 = vpop.f32.mrf.mxu0
        %v844 = vadd.f32 %v621, %v843
        %v845 = vpop.f32.mrf.mxu0
        %v846 = vadd.f32 %v626, %v845
        %847 = vmatmul.bf16.gmra.mxu0 %v713
        %v848 = vpop.f32.mrf.mxu0
        %v849 = vadd.f32 %v631, %v848
        %v850 = vpop.f32.mrf.mxu0
        %v851 = vadd.f32 %v636, %v850
        %852 = vmatmul.bf16.gmra.mxu0 %v714
        %v853 = vpop.f32.mrf.mxu0
        %v854 = vadd.f32 %v641, %v853
        %v855 = vpop.f32.mrf.mxu0
        %v856 = vadd.f32 %v646, %v855
        %857 = vmatmul.bf16.gmra.mxu0 %v715
        %v858 = vpop.f32.mrf.mxu0
        %v859 = vadd.f32 %v651, %v858
        %v860 = vpop.f32.mrf.mxu0
        %v861 = vadd.f32 %v656, %v860
        %862 = vmatmul.bf16.gmra.mxu0 %v716
        %v863 = vpop.f32.mrf.mxu0
        %v864 = vadd.f32 %v661, %v863
        %v865 = vpop.f32.mrf.mxu0
        %v866 = vadd.f32 %v666, %v865
        %867 = vmatmul.bf16.gmra.mxu0 %v717
        %v868 = vpop.f32.mrf.mxu0
        %v869 = vadd.f32 %v671, %v868
        %v870 = vpop.f32.mrf.mxu0
        %v871 = vadd.f32 %v676, %v870
        %872 = vdwg.mxu0
        %873 = vmatpush.bf16.msra.mxu0 %v561
        %874 = vmatpush.bf16.msra.mxu0 %v553
        %875 = vmatpush.bf16.msra.mxu0 %v545
        %876 = vmatpush.bf16.msra.mxu0 %v537
        %877 = vmatpush.bf16.msra.mxu0 %v529
        %878 = vmatpush.bf16.msra.mxu0 %v521
        %879 = vmatpush.bf16.msra.mxu0 %v513
        %880 = vmatpush.bf16.msra.mxu0 %v505
        %881 = vmatmul.bf16.gmra.mxu0 %v710
        %v882 = vpop.f32.mrf.mxu0
        %v883 = vadd.f32 %v601, %v882
        %v884 = vpop.f32.mrf.mxu0
        %v885 = vadd.f32 %v606, %v884
        %886 = vmatmul.bf16.gmra.mxu0 %v711
        %v887 = vpop.f32.mrf.mxu0
        %v888 = vadd.f32 %v611, %v887
        %v889 = vpop.f32.mrf.mxu0
        %v890 = vadd.f32 %v616, %v889
        %891 = vmatmul.bf16.gmra.mxu0 %v712
        %v892 = vpop.f32.mrf.mxu0
        %v893 = vadd.f32 %v621, %v892
        %v894 = vpop.f32.mrf.mxu0
        %v895 = vadd.f32 %v626, %v894
        %896 = vmatmul.bf16.gmra.mxu0 %v713
        %v897 = vpop.f32.mrf.mxu0
        %v898 = vadd.f32 %v631, %v897
        %v899 = vpop.f32.mrf.mxu0
        %v900 = vadd.f32 %v636, %v899
        %901 = vmatmul.bf16.gmra.mxu0 %v714
        %v902 = vpop.f32.mrf.mxu0
        %v903 = vadd.f32 %v641, %v902
        %v904 = vpop.f32.mrf.mxu0
        %v905 = vadd.f32 %v646, %v904
        %906 = vmatmul.bf16.gmra.mxu0 %v715
        %v907 = vpop.f32.mrf.mxu0
        %v908 = vadd.f32 %v651, %v907
        %v909 = vpop.f32.mrf.mxu0
        %v910 = vadd.f32 %v656, %v909
        %911 = vmatmul.bf16.gmra.mxu0 %v716
        %v912 = vpop.f32.mrf.mxu0
        %v913 = vadd.f32 %v661, %v912
        %v914 = vpop.f32.mrf.mxu0
        %v915 = vadd.f32 %v666, %v914
        %916 = vmatmul.bf16.gmra.mxu0 %v717
        %v917 = vpop.f32.mrf.mxu0
        %v918 = vadd.f32 %v671, %v917
        %v919 = vpop.f32.mrf.mxu0
        %v920 = vadd.f32 %v676, %v919
        %921 = vdwg.mxu0
        %922 = vmatpush.bf16.msra.mxu0 %v562
        %923 = vmatpush.bf16.msra.mxu0 %v554
        %924 = vmatpush.bf16.msra.mxu0 %v546
        %925 = vmatpush.bf16.msra.mxu0 %v538
        %926 = vmatpush.bf16.msra.mxu0 %v530
        %927 = vmatpush.bf16.msra.mxu0 %v522
        %928 = vmatpush.bf16.msra.mxu0 %v514
        %929 = vmatpush.bf16.msra.mxu0 %v506
        %930 = vmatmul.bf16.gmra.mxu0 %v710
        %v931 = vpop.f32.mrf.mxu0
        %v932 = vadd.f32 %v601, %v931
        %v933 = vpop.f32.mrf.mxu0
        %v934 = vadd.f32 %v606, %v933
        %935 = vmatmul.bf16.gmra.mxu0 %v711
        %v936 = vpop.f32.mrf.mxu0
        %v937 = vadd.f32 %v611, %v936
        %v938 = vpop.f32.mrf.mxu0
        %v939 = vadd.f32 %v616, %v938
        %940 = vmatmul.bf16.gmra.mxu0 %v712
        %v941 = vpop.f32.mrf.mxu0
        %v942 = vadd.f32 %v621, %v941
        %v943 = vpop.f32.mrf.mxu0
        %v944 = vadd.f32 %v626, %v943
        %945 = vmatmul.bf16.gmra.mxu0 %v713
        %v946 = vpop.f32.mrf.mxu0
        %v947 = vadd.f32 %v631, %v946
        %v948 = vpop.f32.mrf.mxu0
        %v949 = vadd.f32 %v636, %v948
        %950 = vmatmul.bf16.gmra.mxu0 %v714
        %v951 = vpop.f32.mrf.mxu0
        %v952 = vadd.f32 %v641, %v951
        %v953 = vpop.f32.mrf.mxu0
        %v954 = vadd.f32 %v646, %v953
        %955 = vmatmul.bf16.gmra.mxu0 %v715
        %v956 = vpop.f32.mrf.mxu0
        %v957 = vadd.f32 %v651, %v956
        %v958 = vpop.f32.mrf.mxu0
        %v959 = vadd.f32 %v656, %v958
        %960 = vmatmul.bf16.gmra.mxu0 %v716
        %v961 = vpop.f32.mrf.mxu0
        %v962 = vadd.f32 %v661, %v961
        %v963 = vpop.f32.mrf.mxu0
        %v964 = vadd.f32 %v666, %v963
        %965 = vmatmul.bf16.gmra.mxu0 %v717
        %v966 = vpop.f32.mrf.mxu0
        %v967 = vadd.f32 %v671, %v966
        %v968 = vpop.f32.mrf.mxu0
        %v969 = vadd.f32 %v676, %v968
        %970 = vdwg.mxu0
        %971 = vmatpush.bf16.msra.mxu0 %v563
        %972 = vmatpush.bf16.msra.mxu0 %v555
        %973 = vmatpush.bf16.msra.mxu0 %v547
        %974 = vmatpush.bf16.msra.mxu0 %v539
        %975 = vmatpush.bf16.msra.mxu0 %v531
        %976 = vmatpush.bf16.msra.mxu0 %v523
        %977 = vmatpush.bf16.msra.mxu0 %v515
        %978 = vmatpush.bf16.msra.mxu0 %v507
        %979 = vmatmul.bf16.gmra.mxu0 %v710
        %v980 = vpop.f32.mrf.mxu0
        %v981 = vadd.f32 %v601, %v980
        %v982 = vpop.f32.mrf.mxu0
        %v983 = vadd.f32 %v606, %v982
        %984 = vmatmul.bf16.gmra.mxu0 %v711
        %v985 = vpop.f32.mrf.mxu0
        %v986 = vadd.f32 %v611, %v985
        %v987 = vpop.f32.mrf.mxu0
        %v988 = vadd.f32 %v616, %v987
        %989 = vmatmul.bf16.gmra.mxu0 %v712
        %v990 = vpop.f32.mrf.mxu0
        %v991 = vadd.f32 %v621, %v990
        %v992 = vpop.f32.mrf.mxu0
        %v993 = vadd.f32 %v626, %v992
        %994 = vmatmul.bf16.gmra.mxu0 %v713
        %v995 = vpop.f32.mrf.mxu0
        %v996 = vadd.f32 %v631, %v995
        %v997 = vpop.f32.mrf.mxu0
        %v998 = vadd.f32 %v636, %v997
        %999 = vmatmul.bf16.gmra.mxu0 %v714
        %v1000 = vpop.f32.mrf.mxu0
        %v1001 = vadd.f32 %v641, %v1000
        %v1002 = vpop.f32.mrf.mxu0
        %v1003 = vadd.f32 %v646, %v1002
        %1004 = vmatmul.bf16.gmra.mxu0 %v715
        %v1005 = vpop.f32.mrf.mxu0
        %v1006 = vadd.f32 %v651, %v1005
        %v1007 = vpop.f32.mrf.mxu0
        %v1008 = vadd.f32 %v656, %v1007
        %1009 = vmatmul.bf16.gmra.mxu0 %v716
        %v1010 = vpop.f32.mrf.mxu0
        %v1011 = vadd.f32 %v661, %v1010
        %v1012 = vpop.f32.mrf.mxu0
        %v1013 = vadd.f32 %v666, %v1012
        %1014 = vmatmul.bf16.gmra.mxu0 %v717
        %v1015 = vpop.f32.mrf.mxu0
        %v1016 = vadd.f32 %v671, %v1015
        %v1017 = vpop.f32.mrf.mxu0
        %v1018 = vadd.f32 %v676, %v1017
        %1019 = vdwg.mxu0
        %1020 = vmatpush.bf16.msra.mxu0 %v564
        %1021 = vmatpush.bf16.msra.mxu0 %v556
        %1022 = vmatpush.bf16.msra.mxu0 %v548
        %1023 = vmatpush.bf16.msra.mxu0 %v540
        %1024 = vmatpush.bf16.msra.mxu0 %v532
        %1025 = vmatpush.bf16.msra.mxu0 %v524
        %1026 = vmatpush.bf16.msra.mxu0 %v516
        %1027 = vmatpush.bf16.msra.mxu0 %v508
        %1028 = vmatmul.bf16.gmra.mxu0 %v710
        %v1029 = vpop.f32.mrf.mxu0
        %v1030 = vadd.f32 %v601, %v1029
        %v1031 = vpop.f32.mrf.mxu0
        %v1032 = vadd.f32 %v606, %v1031
        %1033 = vmatmul.bf16.gmra.mxu0 %v711
        %v1034 = vpop.f32.mrf.mxu0
        %v1035 = vadd.f32 %v611, %v1034
        %v1036 = vpop.f32.mrf.mxu0
        %v1037 = vadd.f32 %v616, %v1036
        %1038 = vmatmul.bf16.gmra.mxu0 %v712
        %v1039 = vpop.f32.mrf.mxu0
        %v1040 = vadd.f32 %v621, %v1039
        %v1041 = vpop.f32.mrf.mxu0
        %v1042 = vadd.f32 %v626, %v1041
        %1043 = vmatmul.bf16.gmra.mxu0 %v713
        %v1044 = vpop.f32.mrf.mxu0
        %v1045 = vadd.f32 %v631, %v1044
        %v1046 = vpop.f32.mrf.mxu0
        %v1047 = vadd.f32 %v636, %v1046
        %1048 = vmatmul.bf16.gmra.mxu0 %v714
        %v1049 = vpop.f32.mrf.mxu0
        %v1050 = vadd.f32 %v641, %v1049
        %v1051 = vpop.f32.mrf.mxu0
        %v1052 = vadd.f32 %v646, %v1051
        %1053 = vmatmul.bf16.gmra.mxu0 %v715
        %v1054 = vpop.f32.mrf.mxu0
        %v1055 = vadd.f32 %v651, %v1054
        %v1056 = vpop.f32.mrf.mxu0
        %v1057 = vadd.f32 %v656, %v1056
        %1058 = vmatmul.bf16.gmra.mxu0 %v716
        %v1059 = vpop.f32.mrf.mxu0
        %v1060 = vadd.f32 %v661, %v1059
        %v1061 = vpop.f32.mrf.mxu0
        %v1062 = vadd.f32 %v666, %v1061
        %1063 = vmatmul.bf16.gmra.mxu0 %v717
        %v1064 = vpop.f32.mrf.mxu0
        %v1065 = vadd.f32 %v671, %v1064
        %v1066 = vpop.f32.mrf.mxu0
        %v1067 = vadd.f32 %v676, %v1066
        %1068 = vdwg.mxu0
        %1069 = vmatpush.bf16.msra.mxu0 %v565
        %1070 = vmatpush.bf16.msra.mxu0 %v557
        %1071 = vmatpush.bf16.msra.mxu0 %v549
        %1072 = vmatpush.bf16.msra.mxu0 %v541
        %1073 = vmatpush.bf16.msra.mxu0 %v533
        %1074 = vmatpush.bf16.msra.mxu0 %v525
        %1075 = vmatpush.bf16.msra.mxu0 %v517
        %1076 = vmatpush.bf16.msra.mxu0 %v509
        %1077 = vmatmul.bf16.gmra.mxu0 %v710
        %v1078 = vpop.f32.mrf.mxu0
        %v1079 = vadd.f32 %v601, %v1078
        %v1080 = vpop.f32.mrf.mxu0
        %v1081 = vadd.f32 %v606, %v1080
        %1082 = vmatmul.bf16.gmra.mxu0 %v711
        %v1083 = vpop.f32.mrf.mxu0
        %v1084 = vadd.f32 %v611, %v1083
        %v1085 = vpop.f32.mrf.mxu0
        %v1086 = vadd.f32 %v616, %v1085
        %1087 = vmatmul.bf16.gmra.mxu0 %v712
        %v1088 = vpop.f32.mrf.mxu0
        %v1089 = vadd.f32 %v621, %v1088
        %v1090 = vpop.f32.mrf.mxu0
        %v1091 = vadd.f32 %v626, %v1090
        %1092 = vmatmul.bf16.gmra.mxu0 %v713
        %v1093 = vpop.f32.mrf.mxu0
        %v1094 = vadd.f32 %v631, %v1093
        %v1095 = vpop.f32.mrf.mxu0
        %v1096 = vadd.f32 %v636, %v1095
        %1097 = vmatmul.bf16.gmra.mxu0 %v714
        %v1098 = vpop.f32.mrf.mxu0
        %v1099 = vadd.f32 %v641, %v1098
        %v1100 = vpop.f32.mrf.mxu0
        %v1101 = vadd.f32 %v646, %v1100
        %1102 = vmatmul.bf16.gmra.mxu0 %v715
        %v1103 = vpop.f32.mrf.mxu0
        %v1104 = vadd.f32 %v651, %v1103
        %v1105 = vpop.f32.mrf.mxu0
        %v1106 = vadd.f32 %v656, %v1105
        %1107 = vmatmul.bf16.gmra.mxu0 %v716
        %v1108 = vpop.f32.mrf.mxu0
        %v1109 = vadd.f32 %v661, %v1108
        %v1110 = vpop.f32.mrf.mxu0
        %v1111 = vadd.f32 %v666, %v1110
        %1112 = vmatmul.bf16.gmra.mxu0 %v717
        %v1113 = vpop.f32.mrf.mxu0
        %v1114 = vadd.f32 %v671, %v1113
        %v1115 = vpop.f32.mrf.mxu0
        %v1116 = vadd.f32 %v676, %v1115
        %1117 = vdwg.mxu0
        %v1118 = vmax.f32 %v736, 0.0
        %v1119 = vmax.f32 %v785, 0.0
        %v1120 = vmax.f32 %v834, 0.0
        %v1121 = vmax.f32 %v883, 0.0
        %v1122 = vmax.f32 %v932, 0.0
        %v1123 = vmax.f32 %v981, 0.0
        %v1124 = vmax.f32 %v1030, 0.0
        %v1125 = vmax.f32 %v1079, 0.0
        %v1126 = vmax.f32 %v738, 0.0
        %v1127 = vmax.f32 %v787, 0.0
        %v1128 = vmax.f32 %v836, 0.0
        %v1129 = vmax.f32 %v885, 0.0
        %v1130 = vmax.f32 %v934, 0.0
        %v1131 = vmax.f32 %v983, 0.0
        %v1132 = vmax.f32 %v1032, 0.0
        %v1133 = vmax.f32 %v1081, 0.0
        %v1134 = vmax.f32 %v741, 0.0
        %v1135 = vmax.f32 %v790, 0.0
        %v1136 = vmax.f32 %v839, 0.0
        %v1137 = vmax.f32 %v888, 0.0
        %v1138 = vmax.f32 %v937, 0.0
        %v1139 = vmax.f32 %v986, 0.0
        %v1140 = vmax.f32 %v1035, 0.0
        %v1141 = vmax.f32 %v1084, 0.0
        %v1142 = vmax.f32 %v743, 0.0
        %v1143 = vmax.f32 %v792, 0.0
        %v1144 = vmax.f32 %v841, 0.0
        %v1145 = vmax.f32 %v890, 0.0
        %v1146 = vmax.f32 %v939, 0.0
        %v1147 = vmax.f32 %v988, 0.0
        %v1148 = vmax.f32 %v1037, 0.0
        %v1149 = vmax.f32 %v1086, 0.0
        %v1150 = vmax.f32 %v746, 0.0
        %v1151 = vmax.f32 %v795, 0.0
        %v1152 = vmax.f32 %v844, 0.0
        %v1153 = vmax.f32 %v893, 0.0
        %v1154 = vmax.f32 %v942, 0.0
        %v1155 = vmax.f32 %v991, 0.0
        %v1156 = vmax.f32 %v1040, 0.0
        %v1157 = vmax.f32 %v1089, 0.0
        %v1158 = vmax.f32 %v748, 0.0
        %v1159 = vmax.f32 %v797, 0.0
        %v1160 = vmax.f32 %v846, 0.0
        %v1161 = vmax.f32 %v895, 0.0
        %v1162 = vmax.f32 %v944, 0.0
        %v1163 = vmax.f32 %v993, 0.0
        %v1164 = vmax.f32 %v1042, 0.0
        %v1165 = vmax.f32 %v1091, 0.0
        %v1166 = vmax.f32 %v751, 0.0
        %v1167 = vmax.f32 %v800, 0.0
        %v1168 = vmax.f32 %v849, 0.0
        %v1169 = vmax.f32 %v898, 0.0
        %v1170 = vmax.f32 %v947, 0.0
        %v1171 = vmax.f32 %v996, 0.0
        %v1172 = vmax.f32 %v1045, 0.0
        %v1173 = vmax.f32 %v1094, 0.0
        %v1174 = vmax.f32 %v753, 0.0
        %v1175 = vmax.f32 %v802, 0.0
        %v1176 = vmax.f32 %v851, 0.0
        %v1177 = vmax.f32 %v900, 0.0
        %v1178 = vmax.f32 %v949, 0.0
        %v1179 = vmax.f32 %v998, 0.0
        %v1180 = vmax.f32 %v1047, 0.0
        %v1181 = vmax.f32 %v1096, 0.0
        %v1182 = vmax.f32 %v756, 0.0
        %v1183 = vmax.f32 %v805, 0.0
        %v1184 = vmax.f32 %v854, 0.0
        %v1185 = vmax.f32 %v903, 0.0
        %v1186 = vmax.f32 %v952, 0.0
        %v1187 = vmax.f32 %v1001, 0.0
        %v1188 = vmax.f32 %v1050, 0.0
        %v1189 = vmax.f32 %v1099, 0.0
        %v1190 = vmax.f32 %v758, 0.0
        %v1191 = vmax.f32 %v807, 0.0
        %v1192 = vmax.f32 %v856, 0.0
        %v1193 = vmax.f32 %v905, 0.0
        %v1194 = vmax.f32 %v954, 0.0
        %v1195 = vmax.f32 %v1003, 0.0
        %v1196 = vmax.f32 %v1052, 0.0
        %v1197 = vmax.f32 %v1101, 0.0
        %v1198 = vmax.f32 %v761, 0.0
        %v1199 = vmax.f32 %v810, 0.0
        %v1200 = vmax.f32 %v859, 0.0
        %v1201 = vmax.f32 %v908, 0.0
        %v1202 = vmax.f32 %v957, 0.0
        %v1203 = vmax.f32 %v1006, 0.0
        %v1204 = vmax.f32 %v1055, 0.0
        %v1205 = vmax.f32 %v1104, 0.0
        %v1206 = vmax.f32 %v763, 0.0
        %v1207 = vmax.f32 %v812, 0.0
        %v1208 = vmax.f32 %v861, 0.0
        %v1209 = vmax.f32 %v910, 0.0
        %v1210 = vmax.f32 %v959, 0.0
        %v1211 = vmax.f32 %v1008, 0.0
        %v1212 = vmax.f32 %v1057, 0.0
        %v1213 = vmax.f32 %v1106, 0.0
        %v1214 = vmax.f32 %v766, 0.0
        %v1215 = vmax.f32 %v815, 0.0
        %v1216 = vmax.f32 %v864, 0.0
        %v1217 = vmax.f32 %v913, 0.0
        %v1218 = vmax.f32 %v962, 0.0
        %v1219 = vmax.f32 %v1011, 0.0
        %v1220 = vmax.f32 %v1060, 0.0
        %v1221 = vmax.f32 %v1109, 0.0
        %v1222 = vmax.f32 %v768, 0.0
        %v1223 = vmax.f32 %v817, 0.0
        %v1224 = vmax.f32 %v866, 0.0
        %v1225 = vmax.f32 %v915, 0.0
        %v1226 = vmax.f32 %v964, 0.0
        %v1227 = vmax.f32 %v1013, 0.0
        %v1228 = vmax.f32 %v1062, 0.0
        %v1229 = vmax.f32 %v1111, 0.0
        %v1230 = vmax.f32 %v771, 0.0
        %v1231 = vmax.f32 %v820, 0.0
        %v1232 = vmax.f32 %v869, 0.0
        %v1233 = vmax.f32 %v918, 0.0
        %v1234 = vmax.f32 %v967, 0.0
        %v1235 = vmax.f32 %v1016, 0.0
        %v1236 = vmax.f32 %v1065, 0.0
        %v1237 = vmax.f32 %v1114, 0.0
        %v1238 = vmax.f32 %v773, 0.0
        %v1239 = vmax.f32 %v822, 0.0
        %v1240 = vmax.f32 %v871, 0.0
        %v1241 = vmax.f32 %v920, 0.0
        %v1242 = vmax.f32 %v969, 0.0
        %v1243 = vmax.f32 %v1018, 0.0
        %v1244 = vmax.f32 %v1067, 0.0
        %v1245 = vmax.f32 %v1116, 0.0
        %v1246 = vpack.c.bf16 %v1126, %v1118
        %v1247 = vpack.c.bf16 %v1127, %v1119
        %v1248 = vpack.c.bf16 %v1128, %v1120
        %v1249 = vpack.c.bf16 %v1129, %v1121
        %v1250 = vpack.c.bf16 %v1130, %v1122
        %v1251 = vpack.c.bf16 %v1131, %v1123
        %v1252 = vpack.c.bf16 %v1132, %v1124
        %v1253 = vpack.c.bf16 %v1133, %v1125
        %v1254 = vpack.c.bf16 %v1142, %v1134
        %v1255 = vpack.c.bf16 %v1143, %v1135
        %v1256 = vpack.c.bf16 %v1144, %v1136
        %v1257 = vpack.c.bf16 %v1145, %v1137
        %v1258 = vpack.c.bf16 %v1146, %v1138
        %v1259 = vpack.c.bf16 %v1147, %v1139
        %v1260 = vpack.c.bf16 %v1148, %v1140
        %v1261 = vpack.c.bf16 %v1149, %v1141
        %v1262 = vpack.c.bf16 %v1158, %v1150
        %v1263 = vpack.c.bf16 %v1159, %v1151
        %v1264 = vpack.c.bf16 %v1160, %v1152
        %v1265 = vpack.c.bf16 %v1161, %v1153
        %v1266 = vpack.c.bf16 %v1162, %v1154
        %v1267 = vpack.c.bf16 %v1163, %v1155
        %v1268 = vpack.c.bf16 %v1164, %v1156
        %v1269 = vpack.c.bf16 %v1165, %v1157
        %v1270 = vpack.c.bf16 %v1174, %v1166
        %v1271 = vpack.c.bf16 %v1175, %v1167
        %v1272 = vpack.c.bf16 %v1176, %v1168
        %v1273 = vpack.c.bf16 %v1177, %v1169
        %v1274 = vpack.c.bf16 %v1178, %v1170
        %v1275 = vpack.c.bf16 %v1179, %v1171
        %v1276 = vpack.c.bf16 %v1180, %v1172
        %v1277 = vpack.c.bf16 %v1181, %v1173
        %v1278 = vpack.c.bf16 %v1190, %v1182
        %v1279 = vpack.c.bf16 %v1191, %v1183
        %v1280 = vpack.c.bf16 %v1192, %v1184
        %v1281 = vpack.c.bf16 %v1193, %v1185
        %v1282 = vpack.c.bf16 %v1194, %v1186
        %v1283 = vpack.c.bf16 %v1195, %v1187
        %v1284 = vpack.c.bf16 %v1196, %v1188
        %v1285 = vpack.c.bf16 %v1197, %v1189
        %v1286 = vpack.c.bf16 %v1206, %v1198
        %v1287 = vpack.c.bf16 %v1207, %v1199
        %v1288 = vpack.c.bf16 %v1208, %v1200
        %v1289 = vpack.c.bf16 %v1209, %v1201
        %v1290 = vpack.c.bf16 %v1210, %v1202
        %v1291 = vpack.c.bf16 %v1211, %v1203
        %v1292 = vpack.c.bf16 %v1212, %v1204
        %v1293 = vpack.c.bf16 %v1213, %v1205
        %v1294 = vpack.c.bf16 %v1222, %v1214
        %v1295 = vpack.c.bf16 %v1223, %v1215
        %v1296 = vpack.c.bf16 %v1224, %v1216
        %v1297 = vpack.c.bf16 %v1225, %v1217
        %v1298 = vpack.c.bf16 %v1226, %v1218
        %v1299 = vpack.c.bf16 %v1227, %v1219
        %v1300 = vpack.c.bf16 %v1228, %v1220
        %v1301 = vpack.c.bf16 %v1229, %v1221
        %v1302 = vpack.c.bf16 %v1238, %v1230
        %v1303 = vpack.c.bf16 %v1239, %v1231
        %v1304 = vpack.c.bf16 %v1240, %v1232
        %v1305 = vpack.c.bf16 %v1241, %v1233
        %v1306 = vpack.c.bf16 %v1242, %v1234
        %v1307 = vpack.c.bf16 %v1243, %v1235
        %v1308 = vpack.c.bf16 %v1244, %v1236
        %v1309 = vpack.c.bf16 %v1245, %v1237
        %v1310 = vld [vmem:[%s3] sm:$0xf]
        %v1311 = vld [vmem:[%s3 + $0x4] sm:$0xf]
        %v1312 = vld [vmem:[%s3 + $0x8] sm:$0xf]
        %v1313 = vld [vmem:[%s3 + $0xc] sm:$0xf]
        %v1314 = vld [vmem:[%s3 + $0x10] sm:$0xf]
        %v1315 = vld [vmem:[%s3 + $0x14] sm:$0xf]
        %v1316 = vld [vmem:[%s3 + $0x18] sm:$0xf]
        %v1317 = vld [vmem:[%s3 + $0x1c] sm:$0xf]
        %v1318 = vld [vmem:[%s4] sm:$0xff]
        %v1319 = vld [vmem:[%s4 + $0x8] sm:$0xff]
        %v1320 = vld [vmem:[%s4 + $0x10] sm:$0xff]
        %v1321 = vld [vmem:[%s4 + $0x18] sm:$0xff]
        %v1322 = vld [vmem:[%s4 + $0x20] sm:$0xff]
        %v1323 = vld [vmem:[%s4 + $0x28] sm:$0xff]
        %v1324 = vld [vmem:[%s4 + $0x30] sm:$0xff]
        %v1325 = vld [vmem:[%s4 + $0x38] sm:$0xff]
        %1327 = vset.pattern.permute.xlu0 0
        %1328 = vperm.xlu0 %1327, %v1318
        %v1329 = vpop.permute.xlu0 %1328
        %1332 = vset.pattern.permute.xlu0 0
        %1333 = vperm.xlu0 %1332, %v1319
        %v1334 = vpop.permute.xlu0 %1333
        %1337 = vset.pattern.permute.xlu0 0
        %1338 = vperm.xlu0 %1337, %v1320
        %v1339 = vpop.permute.xlu0 %1338
        %1342 = vset.pattern.permute.xlu0 0
        %1343 = vperm.xlu0 %1342, %v1321
        %v1344 = vpop.permute.xlu0 %1343
        %1347 = vset.pattern.permute.xlu0 0
        %1348 = vperm.xlu0 %1347, %v1322
        %v1349 = vpop.permute.xlu0 %1348
        %1352 = vset.pattern.permute.xlu0 0
        %1353 = vperm.xlu0 %1352, %v1323
        %v1354 = vpop.permute.xlu0 %1353
        %1357 = vset.pattern.permute.xlu0 0
        %1358 = vperm.xlu0 %1357, %v1324
        %v1359 = vpop.permute.xlu0 %1358
        %1362 = vset.pattern.permute.xlu0 0
        %1363 = vperm.xlu0 %1362, %v1325
        %v1364 = vpop.permute.xlu0 %1363
        %v1374 = vunpack.c.l.b16 %v1310
        %v1375 = vunpack.c.l.b16 %v1311
        %v1376 = vunpack.c.l.b16 %v1312
        %v1377 = vunpack.c.l.b16 %v1313
        %v1378 = vunpack.c.l.b16 %v1314
        %v1379 = vunpack.c.l.b16 %v1315
        %v1380 = vunpack.c.l.b16 %v1316
        %v1381 = vunpack.c.l.b16 %v1317
        %v1382 = vpack.c.b16 %v1375, %v1374
        %v1383 = vpack.c.b16 %v1377, %v1376
        %v1384 = vpack.c.b16 %v1379, %v1378
        %v1385 = vpack.c.b16 %v1381, %v1380
        %1390 = vmatpush.bf16.msra.mxu0 %v1302
        %1391 = vmatpush.bf16.msra.mxu0 %v1294
        %1392 = vmatpush.bf16.msra.mxu0 %v1286
        %1393 = vmatpush.bf16.msra.mxu0 %v1278
        %1394 = vmatpush.bf16.msra.mxu0 %v1270
        %1395 = vmatpush.bf16.msra.mxu0 %v1262
        %1396 = vmatpush.bf16.msra.mxu0 %v1254
        %1397 = vmatpush.bf16.msra.mxu0 %v1246
        %1398 = vmatmul.bf16.gmra.mxu0 %v1382
        %v1399 = vpop.f32.mrf.mxu0
        %v1400 = vadd.f32 %v1329, %v1399
        %v1401 = vpop.f32.mrf.mxu0
        %v1402 = vadd.f32 %v1334, %v1401
        %1403 = vmatmul.bf16.gmra.mxu0 %v1383
        %v1404 = vpop.f32.mrf.mxu0
        %v1405 = vadd.f32 %v1339, %v1404
        %v1406 = vpop.f32.mrf.mxu0
        %v1407 = vadd.f32 %v1344, %v1406
        %1408 = vmatmul.bf16.gmra.mxu0 %v1384
        %v1409 = vpop.f32.mrf.mxu0
        %v1410 = vadd.f32 %v1349, %v1409
        %v1411 = vpop.f32.mrf.mxu0
        %v1412 = vadd.f32 %v1354, %v1411
        %1413 = vmatmul.bf16.gmra.mxu0 %v1385
        %v1414 = vpop.f32.mrf.mxu0
        %v1415 = vadd.f32 %v1359, %v1414
        %v1416 = vpop.f32.mrf.mxu0
        %v1417 = vadd.f32 %v1364, %v1416
        %1418 = vdwg.mxu0
        %1419 = vmatpush.bf16.msra.mxu0 %v1303
        %1420 = vmatpush.bf16.msra.mxu0 %v1295
        %1421 = vmatpush.bf16.msra.mxu0 %v1287
        %1422 = vmatpush.bf16.msra.mxu0 %v1279
        %1423 = vmatpush.bf16.msra.mxu0 %v1271
        %1424 = vmatpush.bf16.msra.mxu0 %v1263
        %1425 = vmatpush.bf16.msra.mxu0 %v1255
        %1426 = vmatpush.bf16.msra.mxu0 %v1247
        %1427 = vmatmul.bf16.gmra.mxu0 %v1382
        %v1428 = vpop.f32.mrf.mxu0
        %v1429 = vadd.f32 %v1329, %v1428
        %v1430 = vpop.f32.mrf.mxu0
        %v1431 = vadd.f32 %v1334, %v1430
        %1432 = vmatmul.bf16.gmra.mxu0 %v1383
        %v1433 = vpop.f32.mrf.mxu0
        %v1434 = vadd.f32 %v1339, %v1433
        %v1435 = vpop.f32.mrf.mxu0
        %v1436 = vadd.f32 %v1344, %v1435
        %1437 = vmatmul.bf16.gmra.mxu0 %v1384
        %v1438 = vpop.f32.mrf.mxu0
        %v1439 = vadd.f32 %v1349, %v1438
        %v1440 = vpop.f32.mrf.mxu0
        %v1441 = vadd.f32 %v1354, %v1440
        %1442 = vmatmul.bf16.gmra.mxu0 %v1385
        %v1443 = vpop.f32.mrf.mxu0
        %v1444 = vadd.f32 %v1359, %v1443
        %v1445 = vpop.f32.mrf.mxu0
        %v1446 = vadd.f32 %v1364, %v1445
        %1447 = vdwg.mxu0
        %1448 = vmatpush.bf16.msra.mxu0 %v1304
        %1449 = vmatpush.bf16.msra.mxu0 %v1296
        %1450 = vmatpush.bf16.msra.mxu0 %v1288
        %1451 = vmatpush.bf16.msra.mxu0 %v1280
        %1452 = vmatpush.bf16.msra.mxu0 %v1272
        %1453 = vmatpush.bf16.msra.mxu0 %v1264
        %1454 = vmatpush.bf16.msra.mxu0 %v1256
        %1455 = vmatpush.bf16.msra.mxu0 %v1248
        %1456 = vmatmul.bf16.gmra.mxu0 %v1382
        %v1457 = vpop.f32.mrf.mxu0
        %v1458 = vadd.f32 %v1329, %v1457
        %v1459 = vpop.f32.mrf.mxu0
        %v1460 = vadd.f32 %v1334, %v1459
        %1461 = vmatmul.bf16.gmra.mxu0 %v1383
        %v1462 = vpop.f32.mrf.mxu0
        %v1463 = vadd.f32 %v1339, %v1462
        %v1464 = vpop.f32.mrf.mxu0
        %v1465 = vadd.f32 %v1344, %v1464
        %1466 = vmatmul.bf16.gmra.mxu0 %v1384
        %v1467 = vpop.f32.mrf.mxu0
        %v1468 = vadd.f32 %v1349, %v1467
        %v1469 = vpop.f32.mrf.mxu0
        %v1470 = vadd.f32 %v1354, %v1469
        %1471 = vmatmul.bf16.gmra.mxu0 %v1385
        %v1472 = vpop.f32.mrf.mxu0
        %v1473 = vadd.f32 %v1359, %v1472
        %v1474 = vpop.f32.mrf.mxu0
        %v1475 = vadd.f32 %v1364, %v1474
        %1476 = vdwg.mxu0
        %1477 = vmatpush.bf16.msra.mxu0 %v1305
        %1478 = vmatpush.bf16.msra.mxu0 %v1297
        %1479 = vmatpush.bf16.msra.mxu0 %v1289
        %1480 = vmatpush.bf16.msra.mxu0 %v1281
        %1481 = vmatpush.bf16.msra.mxu0 %v1273
        %1482 = vmatpush.bf16.msra.mxu0 %v1265
        %1483 = vmatpush.bf16.msra.mxu0 %v1257
        %1484 = vmatpush.bf16.msra.mxu0 %v1249
        %1485 = vmatmul.bf16.gmra.mxu0 %v1382
        %v1486 = vpop.f32.mrf.mxu0
        %v1487 = vadd.f32 %v1329, %v1486
        %v1488 = vpop.f32.mrf.mxu0
        %v1489 = vadd.f32 %v1334, %v1488
        %1490 = vmatmul.bf16.gmra.mxu0 %v1383
        %v1491 = vpop.f32.mrf.mxu0
        %v1492 = vadd.f32 %v1339, %v1491
        %v1493 = vpop.f32.mrf.mxu0
        %v1494 = vadd.f32 %v1344, %v1493
        %1495 = vmatmul.bf16.gmra.mxu0 %v1384
        %v1496 = vpop.f32.mrf.mxu0
        %v1497 = vadd.f32 %v1349, %v1496
        %v1498 = vpop.f32.mrf.mxu0
        %v1499 = vadd.f32 %v1354, %v1498
        %1500 = vmatmul.bf16.gmra.mxu0 %v1385
        %v1501 = vpop.f32.mrf.mxu0
        %v1502 = vadd.f32 %v1359, %v1501
        %v1503 = vpop.f32.mrf.mxu0
        %v1504 = vadd.f32 %v1364, %v1503
        %1505 = vdwg.mxu0
        %1506 = vmatpush.bf16.msra.mxu0 %v1306
        %1507 = vmatpush.bf16.msra.mxu0 %v1298
        %1508 = vmatpush.bf16.msra.mxu0 %v1290
        %1509 = vmatpush.bf16.msra.mxu0 %v1282
        %1510 = vmatpush.bf16.msra.mxu0 %v1274
        %1511 = vmatpush.bf16.msra.mxu0 %v1266
        %1512 = vmatpush.bf16.msra.mxu0 %v1258
        %1513 = vmatpush.bf16.msra.mxu0 %v1250
        %1514 = vmatmul.bf16.gmra.mxu0 %v1382
        %v1515 = vpop.f32.mrf.mxu0
        %v1516 = vadd.f32 %v1329, %v1515
        %v1517 = vpop.f32.mrf.mxu0
        %v1518 = vadd.f32 %v1334, %v1517
        %1519 = vmatmul.bf16.gmra.mxu0 %v1383
        %v1520 = vpop.f32.mrf.mxu0
        %v1521 = vadd.f32 %v1339, %v1520
        %v1522 = vpop.f32.mrf.mxu0
        %v1523 = vadd.f32 %v1344, %v1522
        %1524 = vmatmul.bf16.gmra.mxu0 %v1384
        %v1525 = vpop.f32.mrf.mxu0
        %v1526 = vadd.f32 %v1349, %v1525
        %v1527 = vpop.f32.mrf.mxu0
        %v1528 = vadd.f32 %v1354, %v1527
        %1529 = vmatmul.bf16.gmra.mxu0 %v1385
        %v1530 = vpop.f32.mrf.mxu0
        %v1531 = vadd.f32 %v1359, %v1530
        %v1532 = vpop.f32.mrf.mxu0
        %v1533 = vadd.f32 %v1364, %v1532
        %1534 = vdwg.mxu0
        %1535 = vmatpush.bf16.msra.mxu0 %v1307
        %1536 = vmatpush.bf16.msra.mxu0 %v1299
        %1537 = vmatpush.bf16.msra.mxu0 %v1291
        %1538 = vmatpush.bf16.msra.mxu0 %v1283
        %1539 = vmatpush.bf16.msra.mxu0 %v1275
        %1540 = vmatpush.bf16.msra.mxu0 %v1267
        %1541 = vmatpush.bf16.msra.mxu0 %v1259
        %1542 = vmatpush.bf16.msra.mxu0 %v1251
        %1543 = vmatmul.bf16.gmra.mxu0 %v1382
        %v1544 = vpop.f32.mrf.mxu0
        %v1545 = vadd.f32 %v1329, %v1544
        %v1546 = vpop.f32.mrf.mxu0
        %v1547 = vadd.f32 %v1334, %v1546
        %1548 = vmatmul.bf16.gmra.mxu0 %v1383
        %v1549 = vpop.f32.mrf.mxu0
        %v1550 = vadd.f32 %v1339, %v1549
        %v1551 = vpop.f32.mrf.mxu0
        %v1552 = vadd.f32 %v1344, %v1551
        %1553 = vmatmul.bf16.gmra.mxu0 %v1384
        %v1554 = vpop.f32.mrf.mxu0
        %v1555 = vadd.f32 %v1349, %v1554
        %v1556 = vpop.f32.mrf.mxu0
        %v1557 = vadd.f32 %v1354, %v1556
        %1558 = vmatmul.bf16.gmra.mxu0 %v1385
        %v1559 = vpop.f32.mrf.mxu0
        %v1560 = vadd.f32 %v1359, %v1559
        %v1561 = vpop.f32.mrf.mxu0
        %v1562 = vadd.f32 %v1364, %v1561
        %1563 = vdwg.mxu0
        %1564 = vmatpush.bf16.msra.mxu0 %v1308
        %1565 = vmatpush.bf16.msra.mxu0 %v1300
        %1566 = vmatpush.bf16.msra.mxu0 %v1292
        %1567 = vmatpush.bf16.msra.mxu0 %v1284
        %1568 = vmatpush.bf16.msra.mxu0 %v1276
        %1569 = vmatpush.bf16.msra.mxu0 %v1268
        %1570 = vmatpush.bf16.msra.mxu0 %v1260
        %1571 = vmatpush.bf16.msra.mxu0 %v1252
        %1572 = vmatmul.bf16.gmra.mxu0 %v1382
        %v1573 = vpop.f32.mrf.mxu0
        %v1574 = vadd.f32 %v1329, %v1573
        %v1575 = vpop.f32.mrf.mxu0
        %v1576 = vadd.f32 %v1334, %v1575
        %1577 = vmatmul.bf16.gmra.mxu0 %v1383
        %v1578 = vpop.f32.mrf.mxu0
        %v1579 = vadd.f32 %v1339, %v1578
        %v1580 = vpop.f32.mrf.mxu0
        %v1581 = vadd.f32 %v1344, %v1580
        %1582 = vmatmul.bf16.gmra.mxu0 %v1384
        %v1583 = vpop.f32.mrf.mxu0
        %v1584 = vadd.f32 %v1349, %v1583
        %v1585 = vpop.f32.mrf.mxu0
        %v1586 = vadd.f32 %v1354, %v1585
        %1587 = vmatmul.bf16.gmra.mxu0 %v1385
        %v1588 = vpop.f32.mrf.mxu0
        %v1589 = vadd.f32 %v1359, %v1588
        %v1590 = vpop.f32.mrf.mxu0
        %v1591 = vadd.f32 %v1364, %v1590
        %1592 = vdwg.mxu0
        %1593 = vmatpush.bf16.msra.mxu0 %v1309
        %1594 = vmatpush.bf16.msra.mxu0 %v1301
        %1595 = vmatpush.bf16.msra.mxu0 %v1293
        %1596 = vmatpush.bf16.msra.mxu0 %v1285
        %1597 = vmatpush.bf16.msra.mxu0 %v1277
        %1598 = vmatpush.bf16.msra.mxu0 %v1269
        %1599 = vmatpush.bf16.msra.mxu0 %v1261
        %1600 = vmatpush.bf16.msra.mxu0 %v1253
        %1601 = vmatmul.bf16.gmra.mxu0 %v1382
        %v1602 = vpop.f32.mrf.mxu0
        %v1603 = vadd.f32 %v1329, %v1602
        %v1604 = vpop.f32.mrf.mxu0
        %v1605 = vadd.f32 %v1334, %v1604
        %1606 = vmatmul.bf16.gmra.mxu0 %v1383
        %v1607 = vpop.f32.mrf.mxu0
        %v1608 = vadd.f32 %v1339, %v1607
        %v1609 = vpop.f32.mrf.mxu0
        %v1610 = vadd.f32 %v1344, %v1609
        %1611 = vmatmul.bf16.gmra.mxu0 %v1384
        %v1612 = vpop.f32.mrf.mxu0
        %v1613 = vadd.f32 %v1349, %v1612
        %v1614 = vpop.f32.mrf.mxu0
        %v1615 = vadd.f32 %v1354, %v1614
        %1616 = vmatmul.bf16.gmra.mxu0 %v1385
        %v1617 = vpop.f32.mrf.mxu0
        %v1618 = vadd.f32 %v1359, %v1617
        %v1619 = vpop.f32.mrf.mxu0
        %v1620 = vadd.f32 %v1364, %v1619
        %1621 = vdwg.mxu0
        %v1622 = vmax.f32 %v1400, 0.0
        %v1623 = vmax.f32 %v1429, 0.0
        %v1624 = vmax.f32 %v1458, 0.0
        %v1625 = vmax.f32 %v1487, 0.0
        %v1626 = vmax.f32 %v1516, 0.0
        %v1627 = vmax.f32 %v1545, 0.0
        %v1628 = vmax.f32 %v1574, 0.0
        %v1629 = vmax.f32 %v1603, 0.0
        %v1630 = vmax.f32 %v1402, 0.0
        %v1631 = vmax.f32 %v1431, 0.0
        %v1632 = vmax.f32 %v1460, 0.0
        %v1633 = vmax.f32 %v1489, 0.0
        %v1634 = vmax.f32 %v1518, 0.0
        %v1635 = vmax.f32 %v1547, 0.0
        %v1636 = vmax.f32 %v1576, 0.0
        %v1637 = vmax.f32 %v1605, 0.0
        %v1638 = vmax.f32 %v1405, 0.0
        %v1639 = vmax.f32 %v1434, 0.0
        %v1640 = vmax.f32 %v1463, 0.0
        %v1641 = vmax.f32 %v1492, 0.0
        %v1642 = vmax.f32 %v1521, 0.0
        %v1643 = vmax.f32 %v1550, 0.0
        %v1644 = vmax.f32 %v1579, 0.0
        %v1645 = vmax.f32 %v1608, 0.0
        %v1646 = vmax.f32 %v1407, 0.0
        %v1647 = vmax.f32 %v1436, 0.0
        %v1648 = vmax.f32 %v1465, 0.0
        %v1649 = vmax.f32 %v1494, 0.0
        %v1650 = vmax.f32 %v1523, 0.0
        %v1651 = vmax.f32 %v1552, 0.0
        %v1652 = vmax.f32 %v1581, 0.0
        %v1653 = vmax.f32 %v1610, 0.0
        %v1654 = vmax.f32 %v1410, 0.0
        %v1655 = vmax.f32 %v1439, 0.0
        %v1656 = vmax.f32 %v1468, 0.0
        %v1657 = vmax.f32 %v1497, 0.0
        %v1658 = vmax.f32 %v1526, 0.0
        %v1659 = vmax.f32 %v1555, 0.0
        %v1660 = vmax.f32 %v1584, 0.0
        %v1661 = vmax.f32 %v1613, 0.0
        %v1662 = vmax.f32 %v1412, 0.0
        %v1663 = vmax.f32 %v1441, 0.0
        %v1664 = vmax.f32 %v1470, 0.0
        %v1665 = vmax.f32 %v1499, 0.0
        %v1666 = vmax.f32 %v1528, 0.0
        %v1667 = vmax.f32 %v1557, 0.0
        %v1668 = vmax.f32 %v1586, 0.0
        %v1669 = vmax.f32 %v1615, 0.0
        %v1670 = vmax.f32 %v1415, 0.0
        %v1671 = vmax.f32 %v1444, 0.0
        %v1672 = vmax.f32 %v1473, 0.0
        %v1673 = vmax.f32 %v1502, 0.0
        %v1674 = vmax.f32 %v1531, 0.0
        %v1675 = vmax.f32 %v1560, 0.0
        %v1676 = vmax.f32 %v1589, 0.0
        %v1677 = vmax.f32 %v1618, 0.0
        %v1678 = vmax.f32 %v1417, 0.0
        %v1679 = vmax.f32 %v1446, 0.0
        %v1680 = vmax.f32 %v1475, 0.0
        %v1681 = vmax.f32 %v1504, 0.0
        %v1682 = vmax.f32 %v1533, 0.0
        %v1683 = vmax.f32 %v1562, 0.0
        %v1684 = vmax.f32 %v1591, 0.0
        %v1685 = vmax.f32 %v1620, 0.0
        %v1686 = vpack.c.bf16 %v1630, %v1622
        %v1687 = vpack.c.bf16 %v1631, %v1623
        %v1688 = vpack.c.bf16 %v1632, %v1624
        %v1689 = vpack.c.bf16 %v1633, %v1625
        %v1690 = vpack.c.bf16 %v1634, %v1626
        %v1691 = vpack.c.bf16 %v1635, %v1627
        %v1692 = vpack.c.bf16 %v1636, %v1628
        %v1693 = vpack.c.bf16 %v1637, %v1629
        %v1694 = vpack.c.bf16 %v1646, %v1638
        %v1695 = vpack.c.bf16 %v1647, %v1639
        %v1696 = vpack.c.bf16 %v1648, %v1640
        %v1697 = vpack.c.bf16 %v1649, %v1641
        %v1698 = vpack.c.bf16 %v1650, %v1642
        %v1699 = vpack.c.bf16 %v1651, %v1643
        %v1700 = vpack.c.bf16 %v1652, %v1644
        %v1701 = vpack.c.bf16 %v1653, %v1645
        %v1702 = vpack.c.bf16 %v1662, %v1654
        %v1703 = vpack.c.bf16 %v1663, %v1655
        %v1704 = vpack.c.bf16 %v1664, %v1656
        %v1705 = vpack.c.bf16 %v1665, %v1657
        %v1706 = vpack.c.bf16 %v1666, %v1658
        %v1707 = vpack.c.bf16 %v1667, %v1659
        %v1708 = vpack.c.bf16 %v1668, %v1660
        %v1709 = vpack.c.bf16 %v1669, %v1661
        %v1710 = vpack.c.bf16 %v1678, %v1670
        %v1711 = vpack.c.bf16 %v1679, %v1671
        %v1712 = vpack.c.bf16 %v1680, %v1672
        %v1713 = vpack.c.bf16 %v1681, %v1673
        %v1714 = vpack.c.bf16 %v1682, %v1674
        %v1715 = vpack.c.bf16 %v1683, %v1675
        %v1716 = vpack.c.bf16 %v1684, %v1676
        %v1717 = vpack.c.bf16 %v1685, %v1677
        %v1718 = vld [vmem:[%s5] sm:$0xf]
        %v1719 = vld [vmem:[%s5 + $0x4] sm:$0xf]
        %v1720 = vld [vmem:[%s5 + $0x8] sm:$0xf]
        %v1721 = vld [vmem:[%s5 + $0xc] sm:$0xf]
        %v1722 = vld [vmem:[%s6] sm:$0xff]
        %v1723 = vld [vmem:[%s6 + $0x8] sm:$0xff]
        %v1724 = vld [vmem:[%s6 + $0x10] sm:$0xff]
        %v1725 = vld [vmem:[%s6 + $0x18] sm:$0xff]
        %1727 = vset.pattern.permute.xlu0 0
        %1728 = vperm.xlu0 %1727, %v1722
        %v1729 = vpop.permute.xlu0 %1728
        %1732 = vset.pattern.permute.xlu0 0
        %1733 = vperm.xlu0 %1732, %v1723
        %v1734 = vpop.permute.xlu0 %1733
        %1737 = vset.pattern.permute.xlu0 0
        %1738 = vperm.xlu0 %1737, %v1724
        %v1739 = vpop.permute.xlu0 %1738
        %1742 = vset.pattern.permute.xlu0 0
        %1743 = vperm.xlu0 %1742, %v1725
        %v1744 = vpop.permute.xlu0 %1743
        %v1750 = vunpack.c.l.b16 %v1718
        %v1751 = vunpack.c.l.b16 %v1719
        %v1752 = vunpack.c.l.b16 %v1720
        %v1753 = vunpack.c.l.b16 %v1721
        %v1754 = vpack.c.b16 %v1751, %v1750
        %v1755 = vpack.c.b16 %v1753, %v1752
        %vm1756 = vcmask 523264
        %v1758 = vsel %vm1756, %v1754, 0
        %v1761 = vsel %vm1756, %v1755, 0
        %1763 = vmatpush.bf16.msra.mxu0 0
        %1764 = vmatpush.bf16.msra.mxu0 0
        %1765 = vmatpush.bf16.msra.mxu0 0
        %1766 = vmatpush.bf16.msra.mxu0 0
        %1767 = vmatpush.bf16.msra.mxu0 %v1710
        %1768 = vmatpush.bf16.msra.mxu0 %v1702
        %1769 = vmatpush.bf16.msra.mxu0 %v1694
        %1770 = vmatpush.bf16.msra.mxu0 %v1686
        %1771 = vmatmul.bf16.gmra.mxu0 %v1758
        %v1772 = vpop.f32.mrf.mxu0
        %v1773 = vadd.f32 %v1729, %v1772
        %v1774 = vpop.f32.mrf.mxu0
        %v1775 = vadd.f32 %v1734, %v1774
        %1776 = vmatmul.bf16.gmra.mxu0 %v1761
        %v1777 = vpop.f32.mrf.mxu0
        %v1778 = vadd.f32 %v1739, %v1777
        %v1779 = vpop.f32.mrf.mxu0
        %v1780 = vadd.f32 %v1744, %v1779
        %1781 = vdwg.mxu0
        %1782 = vmatpush.bf16.msra.mxu0 0
        %1783 = vmatpush.bf16.msra.mxu0 0
        %1784 = vmatpush.bf16.msra.mxu0 0
        %1785 = vmatpush.bf16.msra.mxu0 0
        %1786 = vmatpush.bf16.msra.mxu0 %v1711
        %1787 = vmatpush.bf16.msra.mxu0 %v1703
        %1788 = vmatpush.bf16.msra.mxu0 %v1695
        %1789 = vmatpush.bf16.msra.mxu0 %v1687
        %1790 = vmatmul.bf16.gmra.mxu0 %v1758
        %v1791 = vpop.f32.mrf.mxu0
        %v1792 = vadd.f32 %v1729, %v1791
        %v1793 = vpop.f32.mrf.mxu0
        %v1794 = vadd.f32 %v1734, %v1793
        %1795 = vmatmul.bf16.gmra.mxu0 %v1761
        %v1796 = vpop.f32.mrf.mxu0
        %v1797 = vadd.f32 %v1739, %v1796
        %v1798 = vpop.f32.mrf.mxu0
        %v1799 = vadd.f32 %v1744, %v1798
        %1800 = vdwg.mxu0
        %1801 = vmatpush.bf16.msra.mxu0 0
        %1802 = vmatpush.bf16.msra.mxu0 0
        %1803 = vmatpush.bf16.msra.mxu0 0
        %1804 = vmatpush.bf16.msra.mxu0 0
        %1805 = vmatpush.bf16.msra.mxu0 %v1712
        %1806 = vmatpush.bf16.msra.mxu0 %v1704
        %1807 = vmatpush.bf16.msra.mxu0 %v1696
        %1808 = vmatpush.bf16.msra.mxu0 %v1688
        %1809 = vmatmul.bf16.gmra.mxu0 %v1758
        %v1810 = vpop.f32.mrf.mxu0
        %v1811 = vadd.f32 %v1729, %v1810
        %v1812 = vpop.f32.mrf.mxu0
        %v1813 = vadd.f32 %v1734, %v1812
        %1814 = vmatmul.bf16.gmra.mxu0 %v1761
        %v1815 = vpop.f32.mrf.mxu0
        %v1816 = vadd.f32 %v1739, %v1815
        %v1817 = vpop.f32.mrf.mxu0
        %v1818 = vadd.f32 %v1744, %v1817
        %1819 = vdwg.mxu0
        %1820 = vmatpush.bf16.msra.mxu0 0
        %1821 = vmatpush.bf16.msra.mxu0 0
        %1822 = vmatpush.bf16.msra.mxu0 0
        %1823 = vmatpush.bf16.msra.mxu0 0
        %1824 = vmatpush.bf16.msra.mxu0 %v1713
        %1825 = vmatpush.bf16.msra.mxu0 %v1705
        %1826 = vmatpush.bf16.msra.mxu0 %v1697
        %1827 = vmatpush.bf16.msra.mxu0 %v1689
        %1828 = vmatmul.bf16.gmra.mxu0 %v1758
        %v1829 = vpop.f32.mrf.mxu0
        %v1830 = vadd.f32 %v1729, %v1829
        %v1831 = vpop.f32.mrf.mxu0
        %v1832 = vadd.f32 %v1734, %v1831
        %1833 = vmatmul.bf16.gmra.mxu0 %v1761
        %v1834 = vpop.f32.mrf.mxu0
        %v1835 = vadd.f32 %v1739, %v1834
        %v1836 = vpop.f32.mrf.mxu0
        %v1837 = vadd.f32 %v1744, %v1836
        %1838 = vdwg.mxu0
        %1839 = vmatpush.bf16.msra.mxu0 0
        %1840 = vmatpush.bf16.msra.mxu0 0
        %1841 = vmatpush.bf16.msra.mxu0 0
        %1842 = vmatpush.bf16.msra.mxu0 0
        %1843 = vmatpush.bf16.msra.mxu0 %v1714
        %1844 = vmatpush.bf16.msra.mxu0 %v1706
        %1845 = vmatpush.bf16.msra.mxu0 %v1698
        %1846 = vmatpush.bf16.msra.mxu0 %v1690
        %1847 = vmatmul.bf16.gmra.mxu0 %v1758
        %v1848 = vpop.f32.mrf.mxu0
        %v1849 = vadd.f32 %v1729, %v1848
        %v1850 = vpop.f32.mrf.mxu0
        %v1851 = vadd.f32 %v1734, %v1850
        %1852 = vmatmul.bf16.gmra.mxu0 %v1761
        %v1853 = vpop.f32.mrf.mxu0
        %v1854 = vadd.f32 %v1739, %v1853
        %v1855 = vpop.f32.mrf.mxu0
        %v1856 = vadd.f32 %v1744, %v1855
        %1857 = vdwg.mxu0
        %1858 = vmatpush.bf16.msra.mxu0 0
        %1859 = vmatpush.bf16.msra.mxu0 0
        %1860 = vmatpush.bf16.msra.mxu0 0
        %1861 = vmatpush.bf16.msra.mxu0 0
        %1862 = vmatpush.bf16.msra.mxu0 %v1715
        %1863 = vmatpush.bf16.msra.mxu0 %v1707
        %1864 = vmatpush.bf16.msra.mxu0 %v1699
        %1865 = vmatpush.bf16.msra.mxu0 %v1691
        %1866 = vmatmul.bf16.gmra.mxu0 %v1758
        %v1867 = vpop.f32.mrf.mxu0
        %v1868 = vadd.f32 %v1729, %v1867
        %v1869 = vpop.f32.mrf.mxu0
        %v1870 = vadd.f32 %v1734, %v1869
        %1871 = vmatmul.bf16.gmra.mxu0 %v1761
        %v1872 = vpop.f32.mrf.mxu0
        %v1873 = vadd.f32 %v1739, %v1872
        %v1874 = vpop.f32.mrf.mxu0
        %v1875 = vadd.f32 %v1744, %v1874
        %1876 = vdwg.mxu0
        %1877 = vmatpush.bf16.msra.mxu0 0
        %1878 = vmatpush.bf16.msra.mxu0 0
        %1879 = vmatpush.bf16.msra.mxu0 0
        %1880 = vmatpush.bf16.msra.mxu0 0
        %1881 = vmatpush.bf16.msra.mxu0 %v1716
        %1882 = vmatpush.bf16.msra.mxu0 %v1708
        %1883 = vmatpush.bf16.msra.mxu0 %v1700
        %1884 = vmatpush.bf16.msra.mxu0 %v1692
        %1885 = vmatmul.bf16.gmra.mxu0 %v1758
        %v1886 = vpop.f32.mrf.mxu0
        %v1887 = vadd.f32 %v1729, %v1886
        %v1888 = vpop.f32.mrf.mxu0
        %v1889 = vadd.f32 %v1734, %v1888
        %1890 = vmatmul.bf16.gmra.mxu0 %v1761
        %v1891 = vpop.f32.mrf.mxu0
        %v1892 = vadd.f32 %v1739, %v1891
        %v1893 = vpop.f32.mrf.mxu0
        %v1894 = vadd.f32 %v1744, %v1893
        %1895 = vdwg.mxu0
        %1896 = vmatpush.bf16.msra.mxu0 0
        %1897 = vmatpush.bf16.msra.mxu0 0
        %1898 = vmatpush.bf16.msra.mxu0 0
        %1899 = vmatpush.bf16.msra.mxu0 0
        %1900 = vmatpush.bf16.msra.mxu0 %v1717
        %1901 = vmatpush.bf16.msra.mxu0 %v1709
        %1902 = vmatpush.bf16.msra.mxu0 %v1701
        %1903 = vmatpush.bf16.msra.mxu0 %v1693
        %1904 = vmatmul.bf16.gmra.mxu0 %v1758
        %v1905 = vpop.f32.mrf.mxu0
        %v1906 = vadd.f32 %v1729, %v1905
        %v1907 = vpop.f32.mrf.mxu0
        %v1908 = vadd.f32 %v1734, %v1907
        %1909 = vmatmul.bf16.gmra.mxu0 %v1761
        %v1910 = vpop.f32.mrf.mxu0
        %v1911 = vadd.f32 %v1739, %v1910
        %v1912 = vpop.f32.mrf.mxu0
        %v1913 = vadd.f32 %v1744, %v1912
        %1914 = vdwg.mxu0
        %v1915 = vmax.f32 %v1773, 0.0
        %v1916 = vmax.f32 %v1792, 0.0
        %v1917 = vmax.f32 %v1811, 0.0
        %v1918 = vmax.f32 %v1830, 0.0
        %v1919 = vmax.f32 %v1849, 0.0
        %v1920 = vmax.f32 %v1868, 0.0
        %v1921 = vmax.f32 %v1887, 0.0
        %v1922 = vmax.f32 %v1906, 0.0
        %v1923 = vmax.f32 %v1775, 0.0
        %v1924 = vmax.f32 %v1794, 0.0
        %v1925 = vmax.f32 %v1813, 0.0
        %v1926 = vmax.f32 %v1832, 0.0
        %v1927 = vmax.f32 %v1851, 0.0
        %v1928 = vmax.f32 %v1870, 0.0
        %v1929 = vmax.f32 %v1889, 0.0
        %v1930 = vmax.f32 %v1908, 0.0
        %v1931 = vmax.f32 %v1778, 0.0
        %v1932 = vmax.f32 %v1797, 0.0
        %v1933 = vmax.f32 %v1816, 0.0
        %v1934 = vmax.f32 %v1835, 0.0
        %v1935 = vmax.f32 %v1854, 0.0
        %v1936 = vmax.f32 %v1873, 0.0
        %v1937 = vmax.f32 %v1892, 0.0
        %v1938 = vmax.f32 %v1911, 0.0
        %v1939 = vmax.f32 %v1780, 0.0
        %v1940 = vmax.f32 %v1799, 0.0
        %v1941 = vmax.f32 %v1818, 0.0
        %v1942 = vmax.f32 %v1837, 0.0
        %v1943 = vmax.f32 %v1856, 0.0
        %v1944 = vmax.f32 %v1875, 0.0
        %v1945 = vmax.f32 %v1894, 0.0
        %v1946 = vmax.f32 %v1913, 0.0
        %v1947 = vld [vmem:[%s7] sm:$0xff]
        %v1948 = vld [vmem:[%s7 + $0x8] sm:$0xff]
        %v1949 = vld [vmem:[%s7 + $0x10] sm:$0xff]
        %v1950 = vld [vmem:[%s7 + $0x18] sm:$0xff]
        %1952 = vset.pattern.permute.xlu0 0
        %1953 = vperm.xlu0 %1952, %v1947
        %v1954 = vpop.permute.xlu0 %1953
        %1957 = vset.pattern.permute.xlu0 0
        %1958 = vperm.xlu0 %1957, %v1948
        %v1959 = vpop.permute.xlu0 %1958
        %1962 = vset.pattern.permute.xlu0 0
        %1963 = vperm.xlu0 %1962, %v1949
        %v1964 = vpop.permute.xlu0 %1963
        %1967 = vset.pattern.permute.xlu0 0
        %1968 = vperm.xlu0 %1967, %v1950
        %v1969 = vpop.permute.xlu0 %1968
        %v1971 = vmul.f32 %v1954, %v1915
        %v1972 = vmul.f32 %v1954, %v1916
        %v1973 = vmul.f32 %v1954, %v1917
        %v1974 = vmul.f32 %v1954, %v1918
        %v1975 = vmul.f32 %v1954, %v1919
        %v1976 = vmul.f32 %v1954, %v1920
        %v1977 = vmul.f32 %v1954, %v1921
        %v1978 = vmul.f32 %v1954, %v1922
        %v1979 = vmul.f32 %v1959, %v1923
        %v1980 = vmul.f32 %v1959, %v1924
        %v1981 = vmul.f32 %v1959, %v1925
        %v1982 = vmul.f32 %v1959, %v1926
        %v1983 = vmul.f32 %v1959, %v1927
        %v1984 = vmul.f32 %v1959, %v1928
        %v1985 = vmul.f32 %v1959, %v1929
        %v1986 = vmul.f32 %v1959, %v1930
        %v1987 = vmul.f32 %v1964, %v1931
        %v1988 = vmul.f32 %v1964, %v1932
        %v1989 = vmul.f32 %v1964, %v1933
        %v1990 = vmul.f32 %v1964, %v1934
        %v1991 = vmul.f32 %v1964, %v1935
        %v1992 = vmul.f32 %v1964, %v1936
        %v1993 = vmul.f32 %v1964, %v1937
        %v1994 = vmul.f32 %v1964, %v1938
        %v1995 = vmul.f32 %v1969, %v1939
        %v1996 = vmul.f32 %v1969, %v1940
        %v1997 = vmul.f32 %v1969, %v1941
        %v1998 = vmul.f32 %v1969, %v1942
        %v1999 = vmul.f32 %v1969, %v1943
        %v2000 = vmul.f32 %v1969, %v1944
        %v2001 = vmul.f32 %v1969, %v1945
        %v2002 = vmul.f32 %v1969, %v1946
        %v2003 = vadd.f32 %v1971, %v1979
        %v2004 = vadd.f32 %v2003, %v1987
        %v2005 = vadd.f32 %v2004, %v1995
        %v2006 = vrot.slane %v2005, 4
        %v2007 = vadd.f32 %v2005, %v2006
        %v2008 = vrot.slane %v2007, 2
        %v2009 = vadd.f32 %v2007, %v2008
        %v2010 = vrot.slane %v2009, 1
        %v2011 = vadd.f32 %v2009, %v2010
        %v2012 = vadd.f32 %v1972, %v1980
        %v2013 = vadd.f32 %v2012, %v1988
        %v2014 = vadd.f32 %v2013, %v1996
        %v2015 = vrot.slane %v2014, 4
        %v2016 = vadd.f32 %v2014, %v2015
        %v2017 = vrot.slane %v2016, 2
        %v2018 = vadd.f32 %v2016, %v2017
        %v2019 = vrot.slane %v2018, 1
        %v2020 = vadd.f32 %v2018, %v2019
        %v2021 = vadd.f32 %v1973, %v1981
        %v2022 = vadd.f32 %v2021, %v1989
        %v2023 = vadd.f32 %v2022, %v1997
        %v2024 = vrot.slane %v2023, 4
        %v2025 = vadd.f32 %v2023, %v2024
        %v2026 = vrot.slane %v2025, 2
        %v2027 = vadd.f32 %v2025, %v2026
        %v2028 = vrot.slane %v2027, 1
        %v2029 = vadd.f32 %v2027, %v2028
        %v2030 = vadd.f32 %v1974, %v1982
        %v2031 = vadd.f32 %v2030, %v1990
        %v2032 = vadd.f32 %v2031, %v1998
        %v2033 = vrot.slane %v2032, 4
        %v2034 = vadd.f32 %v2032, %v2033
        %v2035 = vrot.slane %v2034, 2
        %v2036 = vadd.f32 %v2034, %v2035
        %v2037 = vrot.slane %v2036, 1
        %v2038 = vadd.f32 %v2036, %v2037
        %v2039 = vadd.f32 %v1975, %v1983
        %v2040 = vadd.f32 %v2039, %v1991
        %v2041 = vadd.f32 %v2040, %v1999
        %v2042 = vrot.slane %v2041, 4
        %v2043 = vadd.f32 %v2041, %v2042
        %v2044 = vrot.slane %v2043, 2
        %v2045 = vadd.f32 %v2043, %v2044
        %v2046 = vrot.slane %v2045, 1
        %v2047 = vadd.f32 %v2045, %v2046
        %v2048 = vadd.f32 %v1976, %v1984
        %v2049 = vadd.f32 %v2048, %v1992
        %v2050 = vadd.f32 %v2049, %v2000
        %v2051 = vrot.slane %v2050, 4
        %v2052 = vadd.f32 %v2050, %v2051
        %v2053 = vrot.slane %v2052, 2
        %v2054 = vadd.f32 %v2052, %v2053
        %v2055 = vrot.slane %v2054, 1
        %v2056 = vadd.f32 %v2054, %v2055
        %v2057 = vadd.f32 %v1977, %v1985
        %v2058 = vadd.f32 %v2057, %v1993
        %v2059 = vadd.f32 %v2058, %v2001
        %v2060 = vrot.slane %v2059, 4
        %v2061 = vadd.f32 %v2059, %v2060
        %v2062 = vrot.slane %v2061, 2
        %v2063 = vadd.f32 %v2061, %v2062
        %v2064 = vrot.slane %v2063, 1
        %v2065 = vadd.f32 %v2063, %v2064
        %v2066 = vadd.f32 %v1978, %v1986
        %v2067 = vadd.f32 %v2066, %v1994
        %v2068 = vadd.f32 %v2067, %v2002
        %v2069 = vrot.slane %v2068, 4
        %v2070 = vadd.f32 %v2068, %v2069
        %v2071 = vrot.slane %v2070, 2
        %v2072 = vadd.f32 %v2070, %v2071
        %v2073 = vrot.slane %v2072, 1
        %v2074 = vadd.f32 %v2072, %v2073
        %2075 = vset.pattern.permute.xlu0 1
        %2076 = vperm.xlu0 %2075, %v1947
        %v2077 = vpop.permute.xlu0 %2076
        %2079 = vset.pattern.permute.xlu0 1
        %2080 = vperm.xlu0 %2079, %v1948
        %v2081 = vpop.permute.xlu0 %2080
        %2083 = vset.pattern.permute.xlu0 1
        %2084 = vperm.xlu0 %2083, %v1949
        %v2085 = vpop.permute.xlu0 %2084
        %2087 = vset.pattern.permute.xlu0 1
        %2088 = vperm.xlu0 %2087, %v1950
        %v2089 = vpop.permute.xlu0 %2088
        %v2091 = vmul.f32 %v2077, %v1915
        %v2092 = vmul.f32 %v2077, %v1916
        %v2093 = vmul.f32 %v2077, %v1917
        %v2094 = vmul.f32 %v2077, %v1918
        %v2095 = vmul.f32 %v2077, %v1919
        %v2096 = vmul.f32 %v2077, %v1920
        %v2097 = vmul.f32 %v2077, %v1921
        %v2098 = vmul.f32 %v2077, %v1922
        %v2099 = vmul.f32 %v2081, %v1923
        %v2100 = vmul.f32 %v2081, %v1924
        %v2101 = vmul.f32 %v2081, %v1925
        %v2102 = vmul.f32 %v2081, %v1926
        %v2103 = vmul.f32 %v2081, %v1927
        %v2104 = vmul.f32 %v2081, %v1928
        %v2105 = vmul.f32 %v2081, %v1929
        %v2106 = vmul.f32 %v2081, %v1930
        %v2107 = vmul.f32 %v2085, %v1931
        %v2108 = vmul.f32 %v2085, %v1932
        %v2109 = vmul.f32 %v2085, %v1933
        %v2110 = vmul.f32 %v2085, %v1934
        %v2111 = vmul.f32 %v2085, %v1935
        %v2112 = vmul.f32 %v2085, %v1936
        %v2113 = vmul.f32 %v2085, %v1937
        %v2114 = vmul.f32 %v2085, %v1938
        %v2115 = vmul.f32 %v2089, %v1939
        %v2116 = vmul.f32 %v2089, %v1940
        %v2117 = vmul.f32 %v2089, %v1941
        %v2118 = vmul.f32 %v2089, %v1942
        %v2119 = vmul.f32 %v2089, %v1943
        %v2120 = vmul.f32 %v2089, %v1944
        %v2121 = vmul.f32 %v2089, %v1945
        %v2122 = vmul.f32 %v2089, %v1946
        %v2123 = vadd.f32 %v2091, %v2099
        %v2124 = vadd.f32 %v2123, %v2107
        %v2125 = vadd.f32 %v2124, %v2115
        %v2126 = vrot.slane %v2125, 4
        %v2127 = vadd.f32 %v2125, %v2126
        %v2128 = vrot.slane %v2127, 2
        %v2129 = vadd.f32 %v2127, %v2128
        %v2130 = vrot.slane %v2129, 1
        %v2131 = vadd.f32 %v2129, %v2130
        %v2132 = vadd.f32 %v2092, %v2100
        %v2133 = vadd.f32 %v2132, %v2108
        %v2134 = vadd.f32 %v2133, %v2116
        %v2135 = vrot.slane %v2134, 4
        %v2136 = vadd.f32 %v2134, %v2135
        %v2137 = vrot.slane %v2136, 2
        %v2138 = vadd.f32 %v2136, %v2137
        %v2139 = vrot.slane %v2138, 1
        %v2140 = vadd.f32 %v2138, %v2139
        %v2141 = vadd.f32 %v2093, %v2101
        %v2142 = vadd.f32 %v2141, %v2109
        %v2143 = vadd.f32 %v2142, %v2117
        %v2144 = vrot.slane %v2143, 4
        %v2145 = vadd.f32 %v2143, %v2144
        %v2146 = vrot.slane %v2145, 2
        %v2147 = vadd.f32 %v2145, %v2146
        %v2148 = vrot.slane %v2147, 1
        %v2149 = vadd.f32 %v2147, %v2148
        %v2150 = vadd.f32 %v2094, %v2102
        %v2151 = vadd.f32 %v2150, %v2110
        %v2152 = vadd.f32 %v2151, %v2118
        %v2153 = vrot.slane %v2152, 4
        %v2154 = vadd.f32 %v2152, %v2153
        %v2155 = vrot.slane %v2154, 2
        %v2156 = vadd.f32 %v2154, %v2155
        %v2157 = vrot.slane %v2156, 1
        %v2158 = vadd.f32 %v2156, %v2157
        %v2159 = vadd.f32 %v2095, %v2103
        %v2160 = vadd.f32 %v2159, %v2111
        %v2161 = vadd.f32 %v2160, %v2119
        %v2162 = vrot.slane %v2161, 4
        %v2163 = vadd.f32 %v2161, %v2162
        %v2164 = vrot.slane %v2163, 2
        %v2165 = vadd.f32 %v2163, %v2164
        %v2166 = vrot.slane %v2165, 1
        %v2167 = vadd.f32 %v2165, %v2166
        %v2168 = vadd.f32 %v2096, %v2104
        %v2169 = vadd.f32 %v2168, %v2112
        %v2170 = vadd.f32 %v2169, %v2120
        %v2171 = vrot.slane %v2170, 4
        %v2172 = vadd.f32 %v2170, %v2171
        %v2173 = vrot.slane %v2172, 2
        %v2174 = vadd.f32 %v2172, %v2173
        %v2175 = vrot.slane %v2174, 1
        %v2176 = vadd.f32 %v2174, %v2175
        %v2177 = vadd.f32 %v2097, %v2105
        %v2178 = vadd.f32 %v2177, %v2113
        %v2179 = vadd.f32 %v2178, %v2121
        %v2180 = vrot.slane %v2179, 4
        %v2181 = vadd.f32 %v2179, %v2180
        %v2182 = vrot.slane %v2181, 2
        %v2183 = vadd.f32 %v2181, %v2182
        %v2184 = vrot.slane %v2183, 1
        %v2185 = vadd.f32 %v2183, %v2184
        %v2186 = vadd.f32 %v2098, %v2106
        %v2187 = vadd.f32 %v2186, %v2114
        %v2188 = vadd.f32 %v2187, %v2122
        %v2189 = vrot.slane %v2188, 4
        %v2190 = vadd.f32 %v2188, %v2189
        %v2191 = vrot.slane %v2190, 2
        %v2192 = vadd.f32 %v2190, %v2191
        %v2193 = vrot.slane %v2192, 1
        %v2194 = vadd.f32 %v2192, %v2193
        %vm2195 = vcmask 1040384
        %v2196 = vsel %vm2195, %v2011, %v2131
        %v2197 = vsel %vm2195, %v2020, %v2140
        %v2198 = vsel %vm2195, %v2029, %v2149
        %v2199 = vsel %vm2195, %v2038, %v2158
        %v2200 = vsel %vm2195, %v2047, %v2167
        %v2201 = vsel %vm2195, %v2056, %v2176
        %v2202 = vsel %vm2195, %v2065, %v2185
        %v2203 = vsel %vm2195, %v2074, %v2194
        %v2204 = vld [vmem:[%s8] sm:$0x3]
        %2206 = vset.pattern.permute.xlu0 0
        %2207 = vperm.xlu0 %2206, %v2204
        %v2208 = vpop.permute.xlu0 %2207
        %v2210 = vadd.f32 %v2196, %v2208
        %v2211 = vadd.f32 %v2197, %v2208
        %v2212 = vadd.f32 %v2198, %v2208
        %v2213 = vadd.f32 %v2199, %v2208
        %v2214 = vadd.f32 %v2200, %v2208
        %v2215 = vadd.f32 %v2201, %v2208
        %v2216 = vadd.f32 %v2202, %v2208
        %v2217 = vadd.f32 %v2203, %v2208
        %v2218 = vtanh.pop %v2210
        %v2219 = vtanh.pop %v2211
        %v2220 = vtanh.pop %v2212
        %v2221 = vtanh.pop %v2213
        %v2222 = vtanh.pop %v2214
        %v2223 = vtanh.pop %v2215
        %v2224 = vtanh.pop %v2216
        %v2225 = vtanh.pop %v2217
        %v2234 = vrot.slane %v2219, 6
        %v2235 = vrot.slane %v2220, 4
        %v2236 = vrot.slane %v2221, 2
        %v2237 = vrot.slane %v2223, 6
        %v2238 = vrot.slane %v2224, 4
        %v2239 = vrot.slane %v2225, 2
        %vm2240 = vcmask 1041408
        %v2241 = vsel %vm2240, %v2218, %v2234
        %vm2242 = vcmask 1045508
        %v2243 = vsel %vm2242, %v2235, %v2236
        %vm2244 = vcmask 1043456
        %v2245 = vsel %vm2244, %v2241, %v2243
        %v2246 = vsel %vm2240, %v2222, %v2237
        %v2247 = vsel %vm2242, %v2238, %v2239
        %v2248 = vsel %vm2244, %v2246, %v2247
        %2251 = vst [vmem:[%s370] sm:$0xff] %v2245
        %2252 = vst [vmem:[%s370 + $0x8] sm:$0xff] %v2248
        %s2253 = sand.u32 %s244, 1
        %s2254 = scalar_lea.sflag [#allocation4], %s2253
        %s2255 = sand.u32 %s244, 1
        %s2256 = smul.addr %s2255, 16
        %s2257 = scalar_lea.vmem [#allocation5], %s2256
        // Predicated region
        $region61: #{tpu_custom_call.1} parent=55 // pred_check
          %p2258 = pneg %p254
        $region62: #{tpu_custom_call.1} parent=55 // pred_check_branch
          %2260 = sbr.rel (%p2258) target = $region64
        $region63: #{tpu_custom_call.1} parent=55 // pred_region
          %s2261 = smul.u32 8, %s31
          %2263 = vsyncadd %s2254, 0
          %s2264 = smul.addr %s30, 8
          %s2265 = sadd.s32 %s2261, %s2264
          %s2266 = smul.addr %s2265, 2
          %s2267 = scalar_lea.hbm %s9, %s2266
          %s2269 = sshll.u32 %s2257, 4
          %s2270 = int_to_ptr.vmem [resolvable:$true] %s2269
          %s2271 = sshll.u32 %s2267, 4
          %s2272 = int_to_ptr.hbm [resolvable:$true] %s2271
          %2274 = dma.vmem_to_hbm [thread:$0]  %s2270, 256, %s2272, %s2254
        $region64: #{tpu_custom_call.1} parent=55 // pred_fallthru
          _
      $region56: #{tpu_custom_call.1} parent=5 // pred_fallthru
        _
      %p2275 = scmp.le.s32.totalorder 2, %s21
      // Predicated region
      $region65: #{tpu_custom_call.1} parent=5 // pred_check
        %p2276 = pneg %p2275
      $region66: #{tpu_custom_call.1} parent=5 // pred_check_branch
        %2278 = sbr.rel (%p2276) target = $region68
      $region67: #{tpu_custom_call.1} parent=5 // pred_region
        %s2279 = ssub.s32 %s21, 2
        // Predicated region
        $region69: #{tpu_custom_call.1} parent=67 // pred_check
          %p2280 = pneg %p260
        $region70: #{tpu_custom_call.1} parent=67 // pred_check_branch
          %2282 = sbr.rel (%p2280) target = $region72
        $region71: #{tpu_custom_call.1} parent=67 // pred_region
          %s2283 = sand.u32 %s245, 1
          %s2284 = scalar_lea.sflag [#allocation4], %s2283
          %s2285 = sand.u32 %s245, 1
          %s2286 = smul.addr %s2285, 16
          %s2287 = scalar_lea.vmem [#allocation5], %s2286
          %2289 = dma.done %s2284, 256
        $region72: #{tpu_custom_call.1} parent=67 // pred_fallthru
          _
      $region68: #{tpu_custom_call.1} parent=5 // pred_fallthru
        _
    $region6: #{tpu_custom_call.1} parent=1 // loop_footer
      %s25 = sadd.s32 1, %s21
    $region7: #{tpu_custom_call.1} parent=1 // loop_footer_branch
      %20 = sbr.rel target = $region3
    $region8: #{tpu_custom_call.1} parent=1 // loop_exit
      _
    %2290 = vsyncpa [#allocation3], 1
    %s2291 = scalar_lea.sflag [#allocation3], 1
    %2292 = vsyncpa %s2291, 1
    %2293 = vsyncpa [#allocation4], 1
    %s2294 = scalar_lea.sflag [#allocation4], 1
    %2295 = vsyncpa %s2294, 1

</llo_original>
